<compile_context>
chip_gen: v6e
topology: v6e:2x2x1
jax: 0.10.0
libtpu: 0.0.40
codegen_flags: <defaults>
</compile_context>

<pallas_src>
import functools

import jax
import jax.numpy as jnp
from jax import lax
from jax.experimental import pallas as pl
from jax.experimental.pallas import tpu as pltpu


def _round_up(n, m):
    return ((n + m - 1) // m) * m


def dqn_mlp_kernel(x_ref, w1_ref, b1_ref, w2_ref, b2_ref, w3_ref, b3_ref, o_ref,
                   *, compute_dtype):
    # Fused 3-layer MLP: relu(x@W1+b1) -> relu(.@W2+b2) -> .@W3+b3
    # MXU operands in compute_dtype; accumulate / bias-add / ReLU in f32.
    # f32 operands use Precision.HIGHEST so the result is a true f32 matmul
    # (matches PyTorch numerics); bf16 operands use the native MXU path.
    exact_f32 = jnp.dtype(compute_dtype) == jnp.float32
    prec = lax.Precision.HIGHEST if exact_f32 else None

    x = x_ref[...].astype(compute_dtype)
    h1 = jnp.dot(x, w1_ref[...], preferred_element_type=jnp.float32,
                 precision=prec) + b1_ref[...]
    h1 = jnp.maximum(h1, 0.0)
    h2 = jnp.dot(h1.astype(compute_dtype), w2_ref[...],
                 preferred_element_type=jnp.float32, precision=prec) + b2_ref[...]
    h2 = jnp.maximum(h2, 0.0)
    y = jnp.dot(h2.astype(compute_dtype), w3_ref[...],
                preferred_element_type=jnp.float32, precision=prec) + b3_ref[...]
    o_ref[...] = y.astype(o_ref.dtype)


def dqn_forward(x, params, *, tile_m=2048, compute_dtype=jnp.bfloat16):
    """Fused DQN MLP forward.

    x: (B, input_size), f32 or bf16 (pass bf16 to halve the dominant x HBM read at
       large batch; the wrapper never casts x, so there is no extra HBM round trip).
    params: dict of w1,b1,w2,b2,w3,b3 (f32, weights already (in_features, out_features)).
    compute_dtype: MXU operand dtype. bf16 (default) for throughput; jnp.float32 for
       exact parity with the PyTorch module (uses Precision.HIGHEST).
    """
    w1, b1, w2, b2, w3, b3 = (params[k] for k in ("w1", "b1", "w2", "b2", "w3", "b3"))
    B, K = x.shape
    H = w1.shape[1]
    out_size = w3.shape[1]

    # Cast weights once in the wrapper; biases stay f32 (bias-add/ReLU run in f32 on VPU).
    w1c = w1.astype(compute_dtype)
    w2c = w2.astype(compute_dtype)
    w3c = w3.astype(compute_dtype)

    # ---- batch tiling -------------------------------------------------------
    B8 = max(8, _round_up(B, 8))
    TM = _round_up(max(8, min(tile_m, B8)), 8)
    # v7x megacore: for large batches guarantee >= 2 grid steps so the "parallel"
    # batch axis can be sharded across both TensorCores (no effect on v5e/v6e).
    if B8 > 512 and TM >= B8:
        TM = _round_up((B8 + 1) // 2, 8)
    n_tiles = -(-B8 // TM)
    B_pad = n_tiles * TM
    if B_pad != B:
        x = jnp.pad(x, ((0, B_pad - B), (0, 0)))

    x_bytes = jnp.dtype(x.dtype).itemsize
    w_bytes = jnp.dtype(compute_dtype).itemsize
    cost = pl.CostEstimate(
        flops=2 * B_pad * (K * H + H * H + H * out_size),
        transcendentals=0,
        bytes_accessed=(B_pad * K * x_bytes                         # x
                        + (K * H + H * H + H * out_size) * w_bytes  # weights
                        + (2 * H + out_size) * 4                    # biases (f32)
                        + B_pad * out_size * 4),                    # output (f32)
    )

    kernel = functools.partial(dqn_mlp_kernel, compute_dtype=compute_dtype)

    out = pl.pallas_call(
        kernel,
        out_shape=jax.ShapeDtypeStruct((B_pad, out_size), jnp.float32),
        grid=(n_tiles,),
        in_specs=[
            pl.BlockSpec((TM, K), lambda i: (i, 0)),          # x: tiled over batch
            pl.BlockSpec((K, H), lambda i: (0, 0)),           # w1: VMEM-resident
            pl.BlockSpec((1, H), lambda i: (0, 0)),           # b1
            pl.BlockSpec((H, H), lambda i: (0, 0)),           # w2
            pl.BlockSpec((1, H), lambda i: (0, 0)),           # b2
            pl.BlockSpec((H, out_size), lambda i: (0, 0)),    # w3
            pl.BlockSpec((1, out_size), lambda i: (0, 0)),    # b3
        ],
        out_specs=pl.BlockSpec((TM, out_size), lambda i: (i, 0)),
        compiler_params=pltpu.CompilerParams(
            dimension_semantics=("parallel",),                # megacore-shard batch axis
        ),
        cost_estimate=cost,
    )(x, w1c, b1, w2c, b2, w3c, b3)

    return out[:B] if B_pad != B else out


def init_params(key, input_size, output_size, hidden=128):
    """Deterministic init mimicking nn.Linear default (uniform +/- 1/sqrt(fan_in))."""
    ks = jax.random.split(key, 6)

    def lin(kw, kb, fan_in, fan_out):
        bound = 1.0 / jnp.sqrt(fan_in)
        w = jax.random.uniform(kw, (fan_in, fan_out), jnp.float32, -bound, bound)
        b = jax.random.uniform(kb, (1, fan_out), jnp.float32, -bound, bound)
        return w, b

    w1, b1 = lin(ks[0], ks[1], input_size, hidden)
    w2, b2 = lin(ks[2], ks[3], hidden, hidden)
    w3, b3 = lin(ks[4], ks[5], hidden, output_size)
    return {"w1": w1, "b1": b1, "w2": w2, "b2": b2, "w3": w3, "b3": b3}


def dqn_forward_ref(x, p):
    hp = lax.Precision.HIGHEST
    h1 = jnp.maximum(jnp.dot(x, p["w1"], precision=hp) + p["b1"], 0.0)
    h2 = jnp.maximum(jnp.dot(h1, p["w2"], precision=hp) + p["b2"], 0.0)
    return jnp.dot(h2, p["w3"], precision=hp) + p["b3"]


if __name__ == "__main__":
    key = jax.random.PRNGKey(0)
    k_x, k_p, k_xb, k_xc = jax.random.split(key, 4)

    input_size, output_size = 32, 8
    params = init_params(k_p, input_size, output_size)

    # Case 1: tiny act() batch, f32 operands + Precision.HIGHEST -> exact parity.
    batch = 8
    x = jax.random.normal(k_x, (batch, input_size), jnp.float32)
    out = jax.block_until_ready(dqn_forward(x, params, compute_dtype=jnp.float32))
    ref = dqn_forward_ref(x, params)
    assert out.shape == (batch, output_size)
    assert jnp.allclose(out, ref, atol=1e-5, rtol=1e-5), "f32 mismatch vs JAX reference"

    # Case 2: ragged replay-buffer minibatch, default bf16 MXU operands (f32 accumulate).
    batch_mid = 200
    xb = jax.random.normal(k_xb, (batch_mid, input_size), jnp.float32)
    out_b = jax.block_until_ready(dqn_forward(xb, params))
    ref_b = dqn_forward_ref(xb, params)
    assert out_b.shape == (batch_mid, output_size)
    assert jnp.allclose(out_b, ref_b, atol=5e-2, rtol=5e-2), "bf16 mismatch vs reference"

    # Case 3: larger batch with bf16-stored observations (halves the x HBM read);
    # exercises batch padding and the >=2-tile megacore split.
    batch_big = 1000
    xc = jax.random.normal(k_xc, (batch_big, input_size), jnp.float32)
    xc_bf16 = xc.astype(jnp.bfloat16)
    out_c = jax.block_until_ready(dqn_forward(xc_bf16, params))
    ref_c = dqn_forward_ref(xc_bf16.astype(jnp.float32), params)
    assert out_c.shape == (batch_big, output_size)
    assert jnp.allclose(out_c, ref_c, atol=5e-2, rtol=5e-2), "bf16-x mismatch vs reference"

    print("KERNEL_OK")
</pallas_src>

<mosaic_0001>
module attributes {stable_mosaic.version = 11 : i64} {
  func.func @dqn_mlp_kernel(%arg0: i32, %arg1: memref<8x32xf32, #tpu.memory_space<vmem>>, %arg2: memref<32x128xf32, #tpu.memory_space<vmem>>, %arg3: memref<1x128xf32, #tpu.memory_space<vmem>>, %arg4: memref<128x128xf32, #tpu.memory_space<vmem>>, %arg5: memref<1x128xf32, #tpu.memory_space<vmem>>, %arg6: memref<128x8xf32, #tpu.memory_space<vmem>>, %arg7: memref<1x8xf32, #tpu.memory_space<vmem>>, %arg8: memref<8x8xf32, #tpu.memory_space<vmem>>) attributes {dimension_semantics = [#tpu.dimension_semantics<parallel>], iteration_bounds = array<i64: 1>, scalar_prefetch = 0 : i64, scratch_operands = 0 : i64, tpu.core_type = #tpu.core_type<tc>, window_params = [{transform_indices = @transform_0, window_bounds = array<i64: 8, 32>}, {pipeline_mode = #tpu.pipeline_mode<synchronous>, transform_indices = @transform_1, window_bounds = array<i64: 32, 128>}, {pipeline_mode = #tpu.pipeline_mode<synchronous>, transform_indices = @transform_2, window_bounds = array<i64: 1, 128>}, {pipeline_mode = #tpu.pipeline_mode<synchronous>, transform_indices = @transform_3, window_bounds = array<i64: 128, 128>}, {pipeline_mode = #tpu.pipeline_mode<synchronous>, transform_indices = @transform_4, window_bounds = array<i64: 1, 128>}, {pipeline_mode = #tpu.pipeline_mode<synchronous>, transform_indices = @transform_5, window_bounds = array<i64: 128, 8>}, {pipeline_mode = #tpu.pipeline_mode<synchronous>, transform_indices = @transform_6, window_bounds = array<i64: 1, 8>}, {transform_indices = @transform_7, window_bounds = array<i64: 8, 8>}]} {
    %c0 = arith.constant 0 : index
    %c0_0 = arith.constant 0 : index
    %0 = vector.load %arg1[%c0, %c0_0] : memref<8x32xf32, #tpu.memory_space<vmem>>, vector<8x32xf32>
    %c0_1 = arith.constant 0 : index
    %c0_2 = arith.constant 0 : index
    %1 = vector.load %arg2[%c0_1, %c0_2] : memref<32x128xf32, #tpu.memory_space<vmem>>, vector<32x128xf32>
    %cst = arith.constant dense<0.000000e+00> : vector<8x128xf32>
    %2 = tpu.matmul %0, %1, %cst {dimension_numbers = #tpu.dot_dimension_numbers<[1], [0], [0], [1], [0, 0, 1, 1], [], []>, precision = #tpu.contract_precision<fp32>} : vector<8x32xf32>, vector<32x128xf32>, vector<8x128xf32> -> vector<8x128xf32>
    %c0_3 = arith.constant 0 : index
    %c0_4 = arith.constant 0 : index
    %3 = vector.load %arg3[%c0_3, %c0_4] : memref<1x128xf32, #tpu.memory_space<vmem>>, vector<1x128xf32>
    %4 = vector.broadcast %3 : vector<1x128xf32> to vector<8x128xf32>
    %5 = arith.addf %2, %4 : vector<8x128xf32>
    %cst_5 = arith.constant 0.000000e+00 : f32
    %6 = vector.broadcast %cst_5 : f32 to vector<8x128xf32>
    %7 = arith.maximumf %5, %6 : vector<8x128xf32>
    %c0_6 = arith.constant 0 : index
    %c0_7 = arith.constant 0 : index
    %8 = vector.load %arg4[%c0_6, %c0_7] : memref<128x128xf32, #tpu.memory_space<vmem>>, vector<128x128xf32>
    %cst_8 = arith.constant dense<0.000000e+00> : vector<8x128xf32>
    %9 = tpu.matmul %7, %8, %cst_8 {dimension_numbers = #tpu.dot_dimension_numbers<[1], [0], [0], [1], [0, 0, 1, 1], [], []>, precision = #tpu.contract_precision<fp32>} : vector<8x128xf32>, vector<128x128xf32>, vector<8x128xf32> -> vector<8x128xf32>
    %c0_9 = arith.constant 0 : index
    %c0_10 = arith.constant 0 : index
    %10 = vector.load %arg5[%c0_9, %c0_10] : memref<1x128xf32, #tpu.memory_space<vmem>>, vector<1x128xf32>
    %11 = vector.broadcast %10 : vector<1x128xf32> to vector<8x128xf32>
    %12 = arith.addf %9, %11 : vector<8x128xf32>
    %cst_11 = arith.constant 0.000000e+00 : f32
    %13 = vector.broadcast %cst_11 : f32 to vector<8x128xf32>
    %14 = arith.maximumf %12, %13 : vector<8x128xf32>
    %c0_12 = arith.constant 0 : index
    %c0_13 = arith.constant 0 : index
    %15 = vector.load %arg6[%c0_12, %c0_13] : memref<128x8xf32, #tpu.memory_space<vmem>>, vector<128x8xf32>
    %cst_14 = arith.constant dense<0.000000e+00> : vector<8x8xf32>
    %16 = tpu.matmul %14, %15, %cst_14 {dimension_numbers = #tpu.dot_dimension_numbers<[1], [0], [0], [1], [0, 0, 1, 1], [], []>, precision = #tpu.contract_precision<fp32>} : vector<8x128xf32>, vector<128x8xf32>, vector<8x8xf32> -> vector<8x8xf32>
    %c0_15 = arith.constant 0 : index
    %c0_16 = arith.constant 0 : index
    %17 = vector.load %arg7[%c0_15, %c0_16] : memref<1x8xf32, #tpu.memory_space<vmem>>, vector<1x8xf32>
    %18 = vector.broadcast %17 : vector<1x8xf32> to vector<8x8xf32>
    %19 = arith.addf %16, %18 : vector<8x8xf32>
    %c0_17 = arith.constant 0 : index
    %c0_18 = arith.constant 0 : index
    %20 = vector.load %arg8[%c0_17, %c0_18] : memref<8x8xf32, #tpu.memory_space<vmem>>, vector<8x8xf32>
    tpu.vector_store %arg8[%c0_17, %c0_18], %19 {strides = array<i32>} : memref<8x8xf32, #tpu.memory_space<vmem>>, vector<8x8xf32>,
    return
  }
  func.func @transform_0(%arg0: i32) -> (i32, i32) {
    %c0_i32 = arith.constant 0 : i32
    %c0_i32_0 = arith.constant 0 : i32
    return %arg0, %c0_i32 : i32, i32
  }
  func.func @transform_1(%arg0: i32) -> (i32, i32) {
    %c0_i32 = arith.constant 0 : i32
    %c0_i32_0 = arith.constant 0 : i32
    %c0_i32_1 = arith.constant 0 : i32
    return %c0_i32, %c0_i32_0 : i32, i32
  }
  func.func @transform_2(%arg0: i32) -> (i32, i32) {
    %c0_i32 = arith.constant 0 : i32
    %c0_i32_0 = arith.constant 0 : i32
    %c0_i32_1 = arith.constant 0 : i32
    return %c0_i32, %c0_i32_0 : i32, i32
  }
  func.func @transform_3(%arg0: i32) -> (i32, i32) {
    %c0_i32 = arith.constant 0 : i32
    %c0_i32_0 = arith.constant 0 : i32
    %c0_i32_1 = arith.constant 0 : i32
    return %c0_i32, %c0_i32_0 : i32, i32
  }
  func.func @transform_4(%arg0: i32) -> (i32, i32) {
    %c0_i32 = arith.constant 0 : i32
    %c0_i32_0 = arith.constant 0 : i32
    %c0_i32_1 = arith.constant 0 : i32
    return %c0_i32, %c0_i32_0 : i32, i32
  }
  func.func @transform_5(%arg0: i32) -> (i32, i32) {
    %c0_i32 = arith.constant 0 : i32
    %c0_i32_0 = arith.constant 0 : i32
    %c0_i32_1 = arith.constant 0 : i32
    return %c0_i32, %c0_i32_0 : i32, i32
  }
  func.func @transform_6(%arg0: i32) -> (i32, i32) {
    %c0_i32 = arith.constant 0 : i32
    %c0_i32_0 = arith.constant 0 : i32
    %c0_i32_1 = arith.constant 0 : i32
    return %c0_i32, %c0_i32_0 : i32, i32
  }
  func.func @transform_7(%arg0: i32) -> (i32, i32) {
    %c0_i32 = arith.constant 0 : i32
    %c0_i32_0 = arith.constant 0 : i32
    return %arg0, %c0_i32 : i32, i32
  }
}

</mosaic_0001>

<llo_original>
// kernel: tpu_custom_call.1
$region0: #{tpu_custom_call.1}
  #allocation0 [shape = 'u32[]', space=smem, size = 0x4, offset = 0x4, fixed_abs, tag = 'smem constant byte address 0x4 - core index']
  #allocation1 [shape = 'u32[144,128]{1,0:T(1,128)}', space=vmem, size = 0x12000, scoped, tag = 'internal scratch']
  %s0 = inlined_call_operand.vmem [shape: f32[8,32], index: 0, kind: input, shape index: {}]
  %s1 = inlined_call_operand.hbm [shape: f32[32,128], index: 1, kind: input, shape index: {}]
  %s2 = inlined_call_operand.vmem [shape: f32[1,128], index: 2, kind: input, shape index: {}]
  %s3 = inlined_call_operand.vmem [shape: f32[128,128], index: 3, kind: input, shape index: {}]
  %s4 = inlined_call_operand.hbm [shape: f32[1,128], index: 4, kind: input, shape index: {}]
  %s5 = inlined_call_operand.vmem [shape: f32[128,8], index: 5, kind: input, shape index: {}]
  %s6 = inlined_call_operand.vmem [shape: f32[1,8], index: 6, kind: input, shape index: {}]
  %s7 = inlined_call_operand.hbm [shape: f32[8,8], index: 7, kind: output, shape index: {}]
  %s8 = sld [smem:[#allocation0]]
  $region46: #{tpu_custom_call.1} parent=0
    _
  %s10 = ssub.s32 1, %s8
  %s11 = scalar_select 0, %s10, %s8
  $region1: #{tpu_custom_call.1} parent=0
    #allocation2 [shape = 'u8[16384]{0}', space=vmem, size = 0x4000, scoped, tag = 'input window, operand 1, single buffered']
    #allocation3 [shape = 's32[1]{0}', space=sflag, size = 0x4, scoped, tag = 'scoped memory for tpu_custom_call.1']
    #allocation4 [shape = 's32[1]{0}', space=sflag, size = 0x4, scoped, tag = 'scoped memory for tpu_custom_call.1']
    #allocation5 [shape = 'u8[512]{0}', space=vmem, size = 0x400, scoped, tag = 'input window, operand 4, single buffered']
    #allocation6 [shape = 's32[1]{0}', space=sflag, size = 0x4, scoped, tag = 'scoped memory for tpu_custom_call.1']
    #allocation7 [shape = 'u8[4096]{0}', space=vmem, size = 0x1000, scoped, tag = 'output window, operand 0, single buffered']
    %12 = vsyncpa [#allocation3], 0
    %13 = vsyncpa [#allocation6], 0
    %14 = vsyncpa [#allocation4], 0
    // Predicated region
    $region2: #{tpu_custom_call.1} parent=1 // pred_check
      _
    $region3: #{tpu_custom_call.1} parent=1 // pred_check_branch
      %16 = sbr.rel (0) target = $region5
    $region4: #{tpu_custom_call.1} parent=1 // pred_region
      _
    $region5: #{tpu_custom_call.1} parent=1 // pred_fallthru
      _
    // Predicated region
    $region6: #{tpu_custom_call.1} parent=1 // pred_check
      _
    $region7: #{tpu_custom_call.1} parent=1 // pred_check_branch
      %18 = sbr.rel (0) target = $region9
    $region8: #{tpu_custom_call.1} parent=1 // pred_region
      %s20 = ssub.s32 512, 512
      %21 = vsyncadd [#allocation3], %s20
      %s22 = sshll.u32 [#allocation2], 4
      %s23 = int_to_ptr.vmem [resolvable:$true] %s22
      %28 = dma.hbm_to_vmem [thread:$0]  %s1, 512, %s23, [#allocation3], 128, 128, 8
    $region9: #{tpu_custom_call.1} parent=1 // pred_fallthru
      _
    // Predicated region
    $region10: #{tpu_custom_call.1} parent=1 // pred_check
      _
    $region11: #{tpu_custom_call.1} parent=1 // pred_check_branch
      %30 = sbr.rel (0) target = $region13
    $region12: #{tpu_custom_call.1} parent=1 // pred_region
      _
    $region13: #{tpu_custom_call.1} parent=1 // pred_fallthru
      _
    // Predicated region
    $region14: #{tpu_custom_call.1} parent=1 // pred_check
      _
    $region15: #{tpu_custom_call.1} parent=1 // pred_check_branch
      %32 = sbr.rel (0) target = $region17
    $region16: #{tpu_custom_call.1} parent=1 // pred_region
      _
    $region17: #{tpu_custom_call.1} parent=1 // pred_fallthru
      _
    // Predicated region
    $region18: #{tpu_custom_call.1} parent=1 // pred_check
      _
    $region19: #{tpu_custom_call.1} parent=1 // pred_check_branch
      %34 = sbr.rel (0) target = $region21
    $region20: #{tpu_custom_call.1} parent=1 // pred_region
      %s36 = ssub.s32 16, 16
      %37 = vsyncadd [#allocation6], %s36
      %s39 = sshll.u32 [#allocation5], 4
      %s40 = int_to_ptr.vmem [resolvable:$true] %s39
      %42 = dma.hbm_to_vmem [thread:$0]  %s4, 16, %s40, [#allocation6]
    $region21: #{tpu_custom_call.1} parent=1 // pred_fallthru
      _
    // Predicated region
    $region22: #{tpu_custom_call.1} parent=1 // pred_check
      _
    $region23: #{tpu_custom_call.1} parent=1 // pred_check_branch
      %44 = sbr.rel (0) target = $region25
    $region24: #{tpu_custom_call.1} parent=1 // pred_region
      _
    $region25: #{tpu_custom_call.1} parent=1 // pred_fallthru
      _
    // Predicated region
    $region26: #{tpu_custom_call.1} parent=1 // pred_check
      _
    $region27: #{tpu_custom_call.1} parent=1 // pred_check_branch
      %46 = sbr.rel (0) target = $region29
    $region28: #{tpu_custom_call.1} parent=1 // pred_region
      _
    $region29: #{tpu_custom_call.1} parent=1 // pred_fallthru
      _
    // Predicated region
    $region30: #{tpu_custom_call.1} parent=1 // pred_check
      _
    $region31: #{tpu_custom_call.1} parent=1 // pred_check_branch
      %48 = sbr.rel (0) target = $region33
    $region32: #{tpu_custom_call.1} parent=1 // pred_region
      %49 = dma.done [#allocation3], 512
    $region33: #{tpu_custom_call.1} parent=1 // pred_fallthru
      _
    // Predicated region
    $region34: #{tpu_custom_call.1} parent=1 // pred_check
      _
    $region35: #{tpu_custom_call.1} parent=1 // pred_check_branch
      %51 = sbr.rel (0) target = $region37
    $region36: #{tpu_custom_call.1} parent=1 // pred_region
      %52 = dma.done [#allocation6], 16
    $region37: #{tpu_custom_call.1} parent=1 // pred_fallthru
      _
    %v53 = vld [vmem:[%s0] sm:$0xff]
    %v54 = vld [vmem:[#allocation2] sm:$0xff]
    %v55 = vld [vmem:[#allocation2 + $0x8] sm:$0xff]
    %v56 = vld [vmem:[#allocation2 + $0x10] sm:$0xff]
    %v57 = vld [vmem:[#allocation2 + $0x18] sm:$0xff]
    %v58 = vld [vmem:[%s2] sm:$0x1]
    %v60 = vlaneseq
    %v61 = vshrl.u32 %v60, 7
    %v62 = vsub.s32 0, %v61
    %v63 = vrot.slane %v58, %v62
    %vm65 = vcmask 261120
    %v67 = vsel %vm65, %v53, 0
    %69 = vmatprep.subr.mxu0 0.0
    %70 = vmatpush1.msra.mxu0 0.0
    %71 = vmatprep.subr.mxu0 0.0
    %72 = vmatpush1.msra.mxu0 0.0
    %73 = vmatprep.subr.mxu0 0.0
    %74 = vmatpush1.msra.mxu0 0.0
    %75 = vmatprep.subr.mxu0 0.0
    %76 = vmatpush1.msra.mxu0 0.0
    %77 = vmatprep.subr.mxu0 0.0
    %78 = vmatpush1.msra.mxu0 0.0
    %79 = vmatprep.subr.mxu0 0.0
    %80 = vmatpush1.msra.mxu0 0.0
    %81 = vmatprep.subr.mxu0 0.0
    %82 = vmatpush1.msra.mxu0 0.0
    %83 = vmatprep.subr.mxu0 0.0
    %84 = vmatpush1.msra.mxu0 0.0
    %85 = vmatprep.subr.mxu0 0.0
    %86 = vmatpush1.msra.mxu0 0.0
    %87 = vmatprep.subr.mxu0 0.0
    %88 = vmatpush1.msra.mxu0 0.0
    %89 = vmatprep.subr.mxu0 0.0
    %90 = vmatpush1.msra.mxu0 0.0
    %91 = vmatprep.subr.mxu0 0.0
    %92 = vmatpush1.msra.mxu0 0.0
    %93 = vmatprep.subr.mxu0 0.0
    %v94 = vand.u32 %v57, 4294901760
    %95 = vmatpush1.msra.mxu0 %v94
    %96 = vmatprep.subr.mxu0 0.0
    %v97 = vand.u32 %v56, 4294901760
    %98 = vmatpush1.msra.mxu0 %v97
    %99 = vmatprep.subr.mxu0 0.0
    %v100 = vand.u32 %v55, 4294901760
    %101 = vmatpush1.msra.mxu0 %v100
    %102 = vmatprep.subr.mxu0 0.0
    %v103 = vand.u32 %v54, 4294901760
    %104 = vmatpush1.msra.mxu0 %v103
    %105 = vmatprep.subr.mxu0 0.0
    %106 = vmatpush2.msra.mxu0 0.0
    %107 = vmatprep.subr.mxu0 0.0
    %108 = vmatpush2.msra.mxu0 0.0
    %109 = vmatprep.subr.mxu0 0.0
    %110 = vmatpush2.msra.mxu0 0.0
    %111 = vmatprep.subr.mxu0 0.0
    %112 = vmatpush2.msra.mxu0 0.0
    %113 = vmatprep.subr.mxu0 0.0
    %114 = vmatpush2.msra.mxu0 0.0
    %115 = vmatprep.subr.mxu0 0.0
    %116 = vmatpush2.msra.mxu0 0.0
    %117 = vmatprep.subr.mxu0 0.0
    %118 = vmatpush2.msra.mxu0 0.0
    %119 = vmatprep.subr.mxu0 0.0
    %120 = vmatpush2.msra.mxu0 0.0
    %121 = vmatprep.subr.mxu0 0.0
    %122 = vmatpush2.msra.mxu0 0.0
    %123 = vmatprep.subr.mxu0 0.0
    %124 = vmatpush2.msra.mxu0 0.0
    %125 = vmatprep.subr.mxu0 0.0
    %126 = vmatpush2.msra.mxu0 0.0
    %127 = vmatprep.subr.mxu0 0.0
    %128 = vmatpush2.msra.mxu0 0.0
    %129 = vmatprep.subr.mxu0 0.0
    %130 = vmatpush2.msra.mxu0 0.0
    %131 = vmatprep.subr.mxu0 0.0
    %132 = vmatpush2.msra.mxu0 0.0
    %133 = vmatprep.subr.mxu0 0.0
    %134 = vmatpush2.msra.mxu0 0.0
    %135 = vmatprep.subr.mxu0 0.0
    %136 = vmatpush2.msra.mxu0 0.0
    %137 = vmatprep.mubr.f32.mxu0 0.0
    %v138 = vand.u32 %v67, 4294901760
    %v139 = vsub.f32 %v67, %v138
    %v140 = vand.u32 %v139, 4294901760
    %v141 = vsub.f32 %v139, %v140
    %v142 = vand.u32 %v141, 4294901760
    %143 = vmatmul.mubr.f32.gmra.mxu0 %v142
    %v144 = vpop.f32.mrf.mxu0
    %v145 = vadd.f32 %v63, %v144
    %v146 = vpop.f32.mrf.mxu0
    %147 = vdwg.mxu0
    %148 = vmatprep.subr.mxu0 0.0
    %149 = vmatpush1.msra.mxu0 0.0
    %150 = vmatprep.subr.mxu0 0.0
    %151 = vmatpush1.msra.mxu0 0.0
    %152 = vmatprep.subr.mxu0 0.0
    %153 = vmatpush1.msra.mxu0 0.0
    %154 = vmatprep.subr.mxu0 0.0
    %155 = vmatpush1.msra.mxu0 0.0
    %156 = vmatprep.subr.mxu0 0.0
    %157 = vmatpush1.msra.mxu0 0.0
    %158 = vmatprep.subr.mxu0 0.0
    %159 = vmatpush1.msra.mxu0 0.0
    %160 = vmatprep.subr.mxu0 0.0
    %161 = vmatpush1.msra.mxu0 0.0
    %162 = vmatprep.subr.mxu0 0.0
    %163 = vmatpush1.msra.mxu0 0.0
    %164 = vmatprep.subr.mxu0 0.0
    %165 = vmatpush1.msra.mxu0 0.0
    %166 = vmatprep.subr.mxu0 0.0
    %167 = vmatpush1.msra.mxu0 0.0
    %168 = vmatprep.subr.mxu0 0.0
    %169 = vmatpush1.msra.mxu0 0.0
    %170 = vmatprep.subr.mxu0 0.0
    %171 = vmatpush1.msra.mxu0 0.0
    %172 = vmatprep.subr.mxu0 0.0
    %v173 = vand.u32 %v57, 4294901760
    %v174 = vsub.f32 %v57, %v173
    %v175 = vand.u32 %v174, 4294901760
    %v176 = vsub.f32 %v174, %v175
    %v177 = vand.u32 %v176, 4294901760
    %178 = vmatpush1.msra.mxu0 %v177
    %179 = vmatprep.subr.mxu0 0.0
    %v180 = vand.u32 %v56, 4294901760
    %v181 = vsub.f32 %v56, %v180
    %v182 = vand.u32 %v181, 4294901760
    %v183 = vsub.f32 %v181, %v182
    %v184 = vand.u32 %v183, 4294901760
    %185 = vmatpush1.msra.mxu0 %v184
    %186 = vmatprep.subr.mxu0 0.0
    %v187 = vand.u32 %v55, 4294901760
    %v188 = vsub.f32 %v55, %v187
    %v189 = vand.u32 %v188, 4294901760
    %v190 = vsub.f32 %v188, %v189
    %v191 = vand.u32 %v190, 4294901760
    %192 = vmatpush1.msra.mxu0 %v191
    %193 = vmatprep.subr.mxu0 0.0
    %v194 = vand.u32 %v54, 4294901760
    %v195 = vsub.f32 %v54, %v194
    %v196 = vand.u32 %v195, 4294901760
    %v197 = vsub.f32 %v195, %v196
    %v198 = vand.u32 %v197, 4294901760
    %199 = vmatpush1.msra.mxu0 %v198
    %200 = vmatprep.subr.mxu0 0.0
    %201 = vmatpush2.msra.mxu0 0.0
    %202 = vmatprep.subr.mxu0 0.0
    %203 = vmatpush2.msra.mxu0 0.0
    %204 = vmatprep.subr.mxu0 0.0
    %205 = vmatpush2.msra.mxu0 0.0
    %206 = vmatprep.subr.mxu0 0.0
    %207 = vmatpush2.msra.mxu0 0.0
    %208 = vmatprep.subr.mxu0 0.0
    %209 = vmatpush2.msra.mxu0 0.0
    %210 = vmatprep.subr.mxu0 0.0
    %211 = vmatpush2.msra.mxu0 0.0
    %212 = vmatprep.subr.mxu0 0.0
    %213 = vmatpush2.msra.mxu0 0.0
    %214 = vmatprep.subr.mxu0 0.0
    %215 = vmatpush2.msra.mxu0 0.0
    %216 = vmatprep.subr.mxu0 0.0
    %217 = vmatpush2.msra.mxu0 0.0
    %218 = vmatprep.subr.mxu0 0.0
    %219 = vmatpush2.msra.mxu0 0.0
    %220 = vmatprep.subr.mxu0 0.0
    %221 = vmatpush2.msra.mxu0 0.0
    %222 = vmatprep.subr.mxu0 0.0
    %223 = vmatpush2.msra.mxu0 0.0
    %224 = vmatprep.subr.mxu0 0.0
    %225 = vmatpush2.msra.mxu0 0.0
    %226 = vmatprep.subr.mxu0 0.0
    %227 = vmatpush2.msra.mxu0 0.0
    %228 = vmatprep.subr.mxu0 0.0
    %229 = vmatpush2.msra.mxu0 0.0
    %230 = vmatprep.subr.mxu0 0.0
    %231 = vmatpush2.msra.mxu0 0.0
    %232 = vmatprep.mubr.f32.mxu0 0.0
    %v233 = vand.u32 %v67, 4294901760
    %234 = vmatmul.mubr.f32.gmra.mxu0 %v233
    %v235 = vpop.f32.mrf.mxu0
    %v236 = vadd.f32 %v145, %v235
    %v237 = vpop.f32.mrf.mxu0
    %238 = vdwg.mxu0
    %239 = vmatprep.subr.mxu0 0.0
    %240 = vmatpush1.msra.mxu0 0.0
    %241 = vmatprep.subr.mxu0 0.0
    %242 = vmatpush1.msra.mxu0 0.0
    %243 = vmatprep.subr.mxu0 0.0
    %244 = vmatpush1.msra.mxu0 0.0
    %245 = vmatprep.subr.mxu0 0.0
    %246 = vmatpush1.msra.mxu0 0.0
    %247 = vmatprep.subr.mxu0 0.0
    %248 = vmatpush1.msra.mxu0 0.0
    %249 = vmatprep.subr.mxu0 0.0
    %250 = vmatpush1.msra.mxu0 0.0
    %251 = vmatprep.subr.mxu0 0.0
    %252 = vmatpush1.msra.mxu0 0.0
    %253 = vmatprep.subr.mxu0 0.0
    %254 = vmatpush1.msra.mxu0 0.0
    %255 = vmatprep.subr.mxu0 0.0
    %256 = vmatpush1.msra.mxu0 0.0
    %257 = vmatprep.subr.mxu0 0.0
    %258 = vmatpush1.msra.mxu0 0.0
    %259 = vmatprep.subr.mxu0 0.0
    %260 = vmatpush1.msra.mxu0 0.0
    %261 = vmatprep.subr.mxu0 0.0
    %262 = vmatpush1.msra.mxu0 0.0
    %263 = vmatprep.subr.mxu0 0.0
    %v264 = vand.u32 %v57, 4294901760
    %v265 = vsub.f32 %v57, %v264
    %266 = vmatpush1.msra.mxu0 %v265
    %267 = vmatprep.subr.mxu0 0.0
    %v268 = vand.u32 %v56, 4294901760
    %v269 = vsub.f32 %v56, %v268
    %270 = vmatpush1.msra.mxu0 %v269
    %271 = vmatprep.subr.mxu0 0.0
    %v272 = vand.u32 %v55, 4294901760
    %v273 = vsub.f32 %v55, %v272
    %274 = vmatpush1.msra.mxu0 %v273
    %275 = vmatprep.subr.mxu0 0.0
    %v276 = vand.u32 %v54, 4294901760
    %v277 = vsub.f32 %v54, %v276
    %278 = vmatpush1.msra.mxu0 %v277
    %279 = vmatprep.subr.mxu0 0.0
    %280 = vmatpush2.msra.mxu0 0.0
    %281 = vmatprep.subr.mxu0 0.0
    %282 = vmatpush2.msra.mxu0 0.0
    %283 = vmatprep.subr.mxu0 0.0
    %284 = vmatpush2.msra.mxu0 0.0
    %285 = vmatprep.subr.mxu0 0.0
    %286 = vmatpush2.msra.mxu0 0.0
    %287 = vmatprep.subr.mxu0 0.0
    %288 = vmatpush2.msra.mxu0 0.0
    %289 = vmatprep.subr.mxu0 0.0
    %290 = vmatpush2.msra.mxu0 0.0
    %291 = vmatprep.subr.mxu0 0.0
    %292 = vmatpush2.msra.mxu0 0.0
    %293 = vmatprep.subr.mxu0 0.0
    %294 = vmatpush2.msra.mxu0 0.0
    %295 = vmatprep.subr.mxu0 0.0
    %296 = vmatpush2.msra.mxu0 0.0
    %297 = vmatprep.subr.mxu0 0.0
    %298 = vmatpush2.msra.mxu0 0.0
    %299 = vmatprep.subr.mxu0 0.0
    %300 = vmatpush2.msra.mxu0 0.0
    %301 = vmatprep.subr.mxu0 0.0
    %302 = vmatpush2.msra.mxu0 0.0
    %303 = vmatprep.subr.mxu0 0.0
    %304 = vmatpush2.msra.mxu0 0.0
    %305 = vmatprep.subr.mxu0 0.0
    %306 = vmatpush2.msra.mxu0 0.0
    %307 = vmatprep.subr.mxu0 0.0
    %308 = vmatpush2.msra.mxu0 0.0
    %309 = vmatprep.subr.mxu0 0.0
    %310 = vmatpush2.msra.mxu0 0.0
    %311 = vmatprep.mubr.f32.mxu0 0.0
    %v312 = vand.u32 %v67, 4294901760
    %v313 = vsub.f32 %v67, %v312
    %314 = vmatmul.mubr.f32.gmra.mxu0 %v313
    %v315 = vpop.f32.mrf.mxu0
    %v316 = vadd.f32 %v236, %v315
    %v317 = vpop.f32.mrf.mxu0
    %318 = vdwg.mxu0
    %319 = vmatprep.subr.mxu0 0.0
    %320 = vmatpush1.msra.mxu0 0.0
    %321 = vmatprep.subr.mxu0 0.0
    %322 = vmatpush1.msra.mxu0 0.0
    %323 = vmatprep.subr.mxu0 0.0
    %324 = vmatpush1.msra.mxu0 0.0
    %325 = vmatprep.subr.mxu0 0.0
    %326 = vmatpush1.msra.mxu0 0.0
    %327 = vmatprep.subr.mxu0 0.0
    %328 = vmatpush1.msra.mxu0 0.0
    %329 = vmatprep.subr.mxu0 0.0
    %330 = vmatpush1.msra.mxu0 0.0
    %331 = vmatprep.subr.mxu0 0.0
    %332 = vmatpush1.msra.mxu0 0.0
    %333 = vmatprep.subr.mxu0 0.0
    %334 = vmatpush1.msra.mxu0 0.0
    %335 = vmatprep.subr.mxu0 0.0
    %336 = vmatpush1.msra.mxu0 0.0
    %337 = vmatprep.subr.mxu0 0.0
    %338 = vmatpush1.msra.mxu0 0.0
    %339 = vmatprep.subr.mxu0 0.0
    %340 = vmatpush1.msra.mxu0 0.0
    %341 = vmatprep.subr.mxu0 0.0
    %342 = vmatpush1.msra.mxu0 0.0
    %343 = vmatprep.subr.mxu0 0.0
    %v344 = vand.u32 %v57, 4294901760
    %345 = vmatpush1.msra.mxu0 %v344
    %346 = vmatprep.subr.mxu0 0.0
    %v347 = vand.u32 %v56, 4294901760
    %348 = vmatpush1.msra.mxu0 %v347
    %349 = vmatprep.subr.mxu0 0.0
    %v350 = vand.u32 %v55, 4294901760
    %351 = vmatpush1.msra.mxu0 %v350
    %352 = vmatprep.subr.mxu0 0.0
    %v353 = vand.u32 %v54, 4294901760
    %354 = vmatpush1.msra.mxu0 %v353
    %355 = vmatprep.subr.mxu0 0.0
    %356 = vmatpush2.msra.mxu0 0.0
    %357 = vmatprep.subr.mxu0 0.0
    %358 = vmatpush2.msra.mxu0 0.0
    %359 = vmatprep.subr.mxu0 0.0
    %360 = vmatpush2.msra.mxu0 0.0
    %361 = vmatprep.subr.mxu0 0.0
    %362 = vmatpush2.msra.mxu0 0.0
    %363 = vmatprep.subr.mxu0 0.0
    %364 = vmatpush2.msra.mxu0 0.0
    %365 = vmatprep.subr.mxu0 0.0
    %366 = vmatpush2.msra.mxu0 0.0
    %367 = vmatprep.subr.mxu0 0.0
    %368 = vmatpush2.msra.mxu0 0.0
    %369 = vmatprep.subr.mxu0 0.0
    %370 = vmatpush2.msra.mxu0 0.0
    %371 = vmatprep.subr.mxu0 0.0
    %372 = vmatpush2.msra.mxu0 0.0
    %373 = vmatprep.subr.mxu0 0.0
    %374 = vmatpush2.msra.mxu0 0.0
    %375 = vmatprep.subr.mxu0 0.0
    %376 = vmatpush2.msra.mxu0 0.0
    %377 = vmatprep.subr.mxu0 0.0
    %378 = vmatpush2.msra.mxu0 0.0
    %379 = vmatprep.subr.mxu0 0.0
    %380 = vmatpush2.msra.mxu0 0.0
    %381 = vmatprep.subr.mxu0 0.0
    %382 = vmatpush2.msra.mxu0 0.0
    %383 = vmatprep.subr.mxu0 0.0
    %384 = vmatpush2.msra.mxu0 0.0
    %385 = vmatprep.subr.mxu0 0.0
    %386 = vmatpush2.msra.mxu0 0.0
    %387 = vmatprep.mubr.f32.mxu0 0.0
    %v388 = vand.u32 %v67, 4294901760
    %v389 = vsub.f32 %v67, %v388
    %v390 = vand.u32 %v389, 4294901760
    %391 = vmatmul.mubr.f32.gmra.mxu0 %v390
    %v392 = vpop.f32.mrf.mxu0
    %v393 = vadd.f32 %v316, %v392
    %v394 = vpop.f32.mrf.mxu0
    %395 = vdwg.mxu0
    %396 = vmatprep.subr.mxu0 0.0
    %397 = vmatpush1.msra.mxu0 0.0
    %398 = vmatprep.subr.mxu0 0.0
    %399 = vmatpush1.msra.mxu0 0.0
    %400 = vmatprep.subr.mxu0 0.0
    %401 = vmatpush1.msra.mxu0 0.0
    %402 = vmatprep.subr.mxu0 0.0
    %403 = vmatpush1.msra.mxu0 0.0
    %404 = vmatprep.subr.mxu0 0.0
    %405 = vmatpush1.msra.mxu0 0.0
    %406 = vmatprep.subr.mxu0 0.0
    %407 = vmatpush1.msra.mxu0 0.0
    %408 = vmatprep.subr.mxu0 0.0
    %409 = vmatpush1.msra.mxu0 0.0
    %410 = vmatprep.subr.mxu0 0.0
    %411 = vmatpush1.msra.mxu0 0.0
    %412 = vmatprep.subr.mxu0 0.0
    %413 = vmatpush1.msra.mxu0 0.0
    %414 = vmatprep.subr.mxu0 0.0
    %415 = vmatpush1.msra.mxu0 0.0
    %416 = vmatprep.subr.mxu0 0.0
    %417 = vmatpush1.msra.mxu0 0.0
    %418 = vmatprep.subr.mxu0 0.0
    %419 = vmatpush1.msra.mxu0 0.0
    %420 = vmatprep.subr.mxu0 0.0
    %v421 = vand.u32 %v57, 4294901760
    %v422 = vsub.f32 %v57, %v421
    %v423 = vand.u32 %v422, 4294901760
    %424 = vmatpush1.msra.mxu0 %v423
    %425 = vmatprep.subr.mxu0 0.0
    %v426 = vand.u32 %v56, 4294901760
    %v427 = vsub.f32 %v56, %v426
    %v428 = vand.u32 %v427, 4294901760
    %429 = vmatpush1.msra.mxu0 %v428
    %430 = vmatprep.subr.mxu0 0.0
    %v431 = vand.u32 %v55, 4294901760
    %v432 = vsub.f32 %v55, %v431
    %v433 = vand.u32 %v432, 4294901760
    %434 = vmatpush1.msra.mxu0 %v433
    %435 = vmatprep.subr.mxu0 0.0
    %v436 = vand.u32 %v54, 4294901760
    %v437 = vsub.f32 %v54, %v436
    %v438 = vand.u32 %v437, 4294901760
    %439 = vmatpush1.msra.mxu0 %v438
    %440 = vmatprep.subr.mxu0 0.0
    %441 = vmatpush2.msra.mxu0 0.0
    %442 = vmatprep.subr.mxu0 0.0
    %443 = vmatpush2.msra.mxu0 0.0
    %444 = vmatprep.subr.mxu0 0.0
    %445 = vmatpush2.msra.mxu0 0.0
    %446 = vmatprep.subr.mxu0 0.0
    %447 = vmatpush2.msra.mxu0 0.0
    %448 = vmatprep.subr.mxu0 0.0
    %449 = vmatpush2.msra.mxu0 0.0
    %450 = vmatprep.subr.mxu0 0.0
    %451 = vmatpush2.msra.mxu0 0.0
    %452 = vmatprep.subr.mxu0 0.0
    %453 = vmatpush2.msra.mxu0 0.0
    %454 = vmatprep.subr.mxu0 0.0
    %455 = vmatpush2.msra.mxu0 0.0
    %456 = vmatprep.subr.mxu0 0.0
    %457 = vmatpush2.msra.mxu0 0.0
    %458 = vmatprep.subr.mxu0 0.0
    %459 = vmatpush2.msra.mxu0 0.0
    %460 = vmatprep.subr.mxu0 0.0
    %461 = vmatpush2.msra.mxu0 0.0
    %462 = vmatprep.subr.mxu0 0.0
    %463 = vmatpush2.msra.mxu0 0.0
    %464 = vmatprep.subr.mxu0 0.0
    %465 = vmatpush2.msra.mxu0 0.0
    %466 = vmatprep.subr.mxu0 0.0
    %467 = vmatpush2.msra.mxu0 0.0
    %468 = vmatprep.subr.mxu0 0.0
    %469 = vmatpush2.msra.mxu0 0.0
    %470 = vmatprep.subr.mxu0 0.0
    %471 = vmatpush2.msra.mxu0 0.0
    %472 = vmatprep.mubr.f32.mxu0 0.0
    %v473 = vand.u32 %v67, 4294901760
    %474 = vmatmul.mubr.f32.gmra.mxu0 %v473
    %v475 = vpop.f32.mrf.mxu0
    %v476 = vadd.f32 %v393, %v475
    %v477 = vpop.f32.mrf.mxu0
    %478 = vdwg.mxu0
    %479 = vmatprep.subr.mxu0 0.0
    %480 = vmatpush1.msra.mxu0 0.0
    %481 = vmatprep.subr.mxu0 0.0
    %482 = vmatpush1.msra.mxu0 0.0
    %483 = vmatprep.subr.mxu0 0.0
    %484 = vmatpush1.msra.mxu0 0.0
    %485 = vmatprep.subr.mxu0 0.0
    %486 = vmatpush1.msra.mxu0 0.0
    %487 = vmatprep.subr.mxu0 0.0
    %488 = vmatpush1.msra.mxu0 0.0
    %489 = vmatprep.subr.mxu0 0.0
    %490 = vmatpush1.msra.mxu0 0.0
    %491 = vmatprep.subr.mxu0 0.0
    %492 = vmatpush1.msra.mxu0 0.0
    %493 = vmatprep.subr.mxu0 0.0
    %494 = vmatpush1.msra.mxu0 0.0
    %495 = vmatprep.subr.mxu0 0.0
    %496 = vmatpush1.msra.mxu0 0.0
    %497 = vmatprep.subr.mxu0 0.0
    %498 = vmatpush1.msra.mxu0 0.0
    %499 = vmatprep.subr.mxu0 0.0
    %500 = vmatpush1.msra.mxu0 0.0
    %501 = vmatprep.subr.mxu0 0.0
    %502 = vmatpush1.msra.mxu0 0.0
    %503 = vmatprep.subr.mxu0 0.0
    %v504 = vand.u32 %v57, 4294901760
    %505 = vmatpush1.msra.mxu0 %v504
    %506 = vmatprep.subr.mxu0 0.0
    %v507 = vand.u32 %v56, 4294901760
    %508 = vmatpush1.msra.mxu0 %v507
    %509 = vmatprep.subr.mxu0 0.0
    %v510 = vand.u32 %v55, 4294901760
    %511 = vmatpush1.msra.mxu0 %v510
    %512 = vmatprep.subr.mxu0 0.0
    %v513 = vand.u32 %v54, 4294901760
    %514 = vmatpush1.msra.mxu0 %v513
    %515 = vmatprep.subr.mxu0 0.0
    %516 = vmatpush2.msra.mxu0 0.0
    %517 = vmatprep.subr.mxu0 0.0
    %518 = vmatpush2.msra.mxu0 0.0
    %519 = vmatprep.subr.mxu0 0.0
    %520 = vmatpush2.msra.mxu0 0.0
    %521 = vmatprep.subr.mxu0 0.0
    %522 = vmatpush2.msra.mxu0 0.0
    %523 = vmatprep.subr.mxu0 0.0
    %524 = vmatpush2.msra.mxu0 0.0
    %525 = vmatprep.subr.mxu0 0.0
    %526 = vmatpush2.msra.mxu0 0.0
    %527 = vmatprep.subr.mxu0 0.0
    %528 = vmatpush2.msra.mxu0 0.0
    %529 = vmatprep.subr.mxu0 0.0
    %530 = vmatpush2.msra.mxu0 0.0
    %531 = vmatprep.subr.mxu0 0.0
    %532 = vmatpush2.msra.mxu0 0.0
    %533 = vmatprep.subr.mxu0 0.0
    %534 = vmatpush2.msra.mxu0 0.0
    %535 = vmatprep.subr.mxu0 0.0
    %536 = vmatpush2.msra.mxu0 0.0
    %537 = vmatprep.subr.mxu0 0.0
    %538 = vmatpush2.msra.mxu0 0.0
    %539 = vmatprep.subr.mxu0 0.0
    %540 = vmatpush2.msra.mxu0 0.0
    %541 = vmatprep.subr.mxu0 0.0
    %542 = vmatpush2.msra.mxu0 0.0
    %543 = vmatprep.subr.mxu0 0.0
    %544 = vmatpush2.msra.mxu0 0.0
    %545 = vmatprep.subr.mxu0 0.0
    %546 = vmatpush2.msra.mxu0 0.0
    %547 = vmatprep.mubr.f32.mxu0 0.0
    %v548 = vand.u32 %v67, 4294901760
    %549 = vmatmul.mubr.f32.gmra.mxu0 %v548
    %v550 = vpop.f32.mrf.mxu0
    %v551 = vadd.f32 %v476, %v550
    %v552 = vpop.f32.mrf.mxu0
    %553 = vdwg.mxu0
    %v554 = vmax.f32 %v551, 0.0
    %v555 = vld [vmem:[%s3] sm:$0xff]
    %v556 = vld [vmem:[%s3 + $0x8] sm:$0xff]
    %v557 = vld [vmem:[%s3 + $0x10] sm:$0xff]
    %v558 = vld [vmem:[%s3 + $0x18] sm:$0xff]
    %v559 = vld [vmem:[%s3 + $0x20] sm:$0xff]
    %v560 = vld [vmem:[%s3 + $0x28] sm:$0xff]
    %v561 = vld [vmem:[%s3 + $0x30] sm:$0xff]
    %v562 = vld [vmem:[%s3 + $0x38] sm:$0xff]
    %v563 = vld [vmem:[%s3 + $0x40] sm:$0xff]
    %v564 = vld [vmem:[%s3 + $0x48] sm:$0xff]
    %v565 = vld [vmem:[%s3 + $0x50] sm:$0xff]
    %v566 = vld [vmem:[%s3 + $0x58] sm:$0xff]
    %v567 = vld [vmem:[%s3 + $0x60] sm:$0xff]
    %v568 = vld [vmem:[%s3 + $0x68] sm:$0xff]
    %v569 = vld [vmem:[%s3 + $0x70] sm:$0xff]
    %v570 = vld [vmem:[%s3 + $0x78] sm:$0xff]
    %v571 = vld [vmem:[#allocation5] sm:$0x1]
    %v573 = vlaneseq
    %v574 = vshrl.u32 %v573, 7
    %v575 = vsub.s32 0, %v574
    %v576 = vrot.slane %v571, %v575
    %578 = vmatprep.subr.mxu0 0.0
    %v579 = vand.u32 %v570, 4294901760
    %580 = vmatpush1.msra.mxu0 %v579
    %581 = vmatprep.subr.mxu0 0.0
    %v582 = vand.u32 %v569, 4294901760
    %583 = vmatpush1.msra.mxu0 %v582
    %584 = vmatprep.subr.mxu0 0.0
    %v585 = vand.u32 %v568, 4294901760
    %586 = vmatpush1.msra.mxu0 %v585
    %587 = vmatprep.subr.mxu0 0.0
    %v588 = vand.u32 %v567, 4294901760
    %589 = vmatpush1.msra.mxu0 %v588
    %590 = vmatprep.subr.mxu0 0.0
    %v591 = vand.u32 %v566, 4294901760
    %592 = vmatpush1.msra.mxu0 %v591
    %593 = vmatprep.subr.mxu0 0.0
    %v594 = vand.u32 %v565, 4294901760
    %595 = vmatpush1.msra.mxu0 %v594
    %596 = vmatprep.subr.mxu0 0.0
    %v597 = vand.u32 %v564, 4294901760
    %598 = vmatpush1.msra.mxu0 %v597
    %599 = vmatprep.subr.mxu0 0.0
    %v600 = vand.u32 %v563, 4294901760
    %601 = vmatpush1.msra.mxu0 %v600
    %602 = vmatprep.subr.mxu0 0.0
    %v603 = vand.u32 %v562, 4294901760
    %604 = vmatpush1.msra.mxu0 %v603
    %605 = vmatprep.subr.mxu0 0.0
    %v606 = vand.u32 %v561, 4294901760
    %607 = vmatpush1.msra.mxu0 %v606
    %608 = vmatprep.subr.mxu0 0.0
    %v609 = vand.u32 %v560, 4294901760
    %610 = vmatpush1.msra.mxu0 %v609
    %611 = vmatprep.subr.mxu0 0.0
    %v612 = vand.u32 %v559, 4294901760
    %613 = vmatpush1.msra.mxu0 %v612
    %614 = vmatprep.subr.mxu0 0.0
    %v615 = vand.u32 %v558, 4294901760
    %616 = vmatpush1.msra.mxu0 %v615
    %617 = vmatprep.subr.mxu0 0.0
    %v618 = vand.u32 %v557, 4294901760
    %619 = vmatpush1.msra.mxu0 %v618
    %620 = vmatprep.subr.mxu0 0.0
    %v621 = vand.u32 %v556, 4294901760
    %622 = vmatpush1.msra.mxu0 %v621
    %623 = vmatprep.subr.mxu0 0.0
    %v624 = vand.u32 %v555, 4294901760
    %625 = vmatpush1.msra.mxu0 %v624
    %626 = vmatprep.subr.mxu0 0.0
    %627 = vmatpush2.msra.mxu0 0.0
    %628 = vmatprep.subr.mxu0 0.0
    %629 = vmatpush2.msra.mxu0 0.0
    %630 = vmatprep.subr.mxu0 0.0
    %631 = vmatpush2.msra.mxu0 0.0
    %632 = vmatprep.subr.mxu0 0.0
    %633 = vmatpush2.msra.mxu0 0.0
    %634 = vmatprep.subr.mxu0 0.0
    %635 = vmatpush2.msra.mxu0 0.0
    %636 = vmatprep.subr.mxu0 0.0
    %637 = vmatpush2.msra.mxu0 0.0
    %638 = vmatprep.subr.mxu0 0.0
    %639 = vmatpush2.msra.mxu0 0.0
    %640 = vmatprep.subr.mxu0 0.0
    %641 = vmatpush2.msra.mxu0 0.0
    %642 = vmatprep.subr.mxu0 0.0
    %643 = vmatpush2.msra.mxu0 0.0
    %644 = vmatprep.subr.mxu0 0.0
    %645 = vmatpush2.msra.mxu0 0.0
    %646 = vmatprep.subr.mxu0 0.0
    %647 = vmatpush2.msra.mxu0 0.0
    %648 = vmatprep.subr.mxu0 0.0
    %649 = vmatpush2.msra.mxu0 0.0
    %650 = vmatprep.subr.mxu0 0.0
    %651 = vmatpush2.msra.mxu0 0.0
    %652 = vmatprep.subr.mxu0 0.0
    %653 = vmatpush2.msra.mxu0 0.0
    %654 = vmatprep.subr.mxu0 0.0
    %655 = vmatpush2.msra.mxu0 0.0
    %656 = vmatprep.subr.mxu0 0.0
    %657 = vmatpush2.msra.mxu0 0.0
    %658 = vmatprep.mubr.f32.mxu0 0.0
    %v659 = vand.u32 %v554, 4294901760
    %v660 = vsub.f32 %v554, %v659
    %v661 = vand.u32 %v660, 4294901760
    %v662 = vsub.f32 %v660, %v661
    %v663 = vand.u32 %v662, 4294901760
    %664 = vmatmul.mubr.f32.gmra.mxu0 %v663
    %v665 = vpop.f32.mrf.mxu0
    %v666 = vadd.f32 %v576, %v665
    %v667 = vpop.f32.mrf.mxu0
    %668 = vdwg.mxu0
    %669 = vmatprep.subr.mxu0 0.0
    %v670 = vand.u32 %v570, 4294901760
    %v671 = vsub.f32 %v570, %v670
    %v672 = vand.u32 %v671, 4294901760
    %v673 = vsub.f32 %v671, %v672
    %v674 = vand.u32 %v673, 4294901760
    %675 = vmatpush1.msra.mxu0 %v674
    %676 = vmatprep.subr.mxu0 0.0
    %v677 = vand.u32 %v569, 4294901760
    %v678 = vsub.f32 %v569, %v677
    %v679 = vand.u32 %v678, 4294901760
    %v680 = vsub.f32 %v678, %v679
    %v681 = vand.u32 %v680, 4294901760
    %682 = vmatpush1.msra.mxu0 %v681
    %683 = vmatprep.subr.mxu0 0.0
    %v684 = vand.u32 %v568, 4294901760
    %v685 = vsub.f32 %v568, %v684
    %v686 = vand.u32 %v685, 4294901760
    %v687 = vsub.f32 %v685, %v686
    %v688 = vand.u32 %v687, 4294901760
    %689 = vmatpush1.msra.mxu0 %v688
    %690 = vmatprep.subr.mxu0 0.0
    %v691 = vand.u32 %v567, 4294901760
    %v692 = vsub.f32 %v567, %v691
    %v693 = vand.u32 %v692, 4294901760
    %v694 = vsub.f32 %v692, %v693
    %v695 = vand.u32 %v694, 4294901760
    %696 = vmatpush1.msra.mxu0 %v695
    %697 = vmatprep.subr.mxu0 0.0
    %v698 = vand.u32 %v566, 4294901760
    %v699 = vsub.f32 %v566, %v698
    %v700 = vand.u32 %v699, 4294901760
    %v701 = vsub.f32 %v699, %v700
    %v702 = vand.u32 %v701, 4294901760
    %703 = vmatpush1.msra.mxu0 %v702
    %704 = vmatprep.subr.mxu0 0.0
    %v705 = vand.u32 %v565, 4294901760
    %v706 = vsub.f32 %v565, %v705
    %v707 = vand.u32 %v706, 4294901760
    %v708 = vsub.f32 %v706, %v707
    %v709 = vand.u32 %v708, 4294901760
    %710 = vmatpush1.msra.mxu0 %v709
    %711 = vmatprep.subr.mxu0 0.0
    %v712 = vand.u32 %v564, 4294901760
    %v713 = vsub.f32 %v564, %v712
    %v714 = vand.u32 %v713, 4294901760
    %v715 = vsub.f32 %v713, %v714
    %v716 = vand.u32 %v715, 4294901760
    %717 = vmatpush1.msra.mxu0 %v716
    %718 = vmatprep.subr.mxu0 0.0
    %v719 = vand.u32 %v563, 4294901760
    %v720 = vsub.f32 %v563, %v719
    %v721 = vand.u32 %v720, 4294901760
    %v722 = vsub.f32 %v720, %v721
    %v723 = vand.u32 %v722, 4294901760
    %724 = vmatpush1.msra.mxu0 %v723
    %725 = vmatprep.subr.mxu0 0.0
    %v726 = vand.u32 %v562, 4294901760
    %v727 = vsub.f32 %v562, %v726
    %v728 = vand.u32 %v727, 4294901760
    %v729 = vsub.f32 %v727, %v728
    %v730 = vand.u32 %v729, 4294901760
    %731 = vmatpush1.msra.mxu0 %v730
    %732 = vmatprep.subr.mxu0 0.0
    %v733 = vand.u32 %v561, 4294901760
    %v734 = vsub.f32 %v561, %v733
    %v735 = vand.u32 %v734, 4294901760
    %v736 = vsub.f32 %v734, %v735
    %v737 = vand.u32 %v736, 4294901760
    %738 = vmatpush1.msra.mxu0 %v737
    %739 = vmatprep.subr.mxu0 0.0
    %v740 = vand.u32 %v560, 4294901760
    %v741 = vsub.f32 %v560, %v740
    %v742 = vand.u32 %v741, 4294901760
    %v743 = vsub.f32 %v741, %v742
    %v744 = vand.u32 %v743, 4294901760
    %745 = vmatpush1.msra.mxu0 %v744
    %746 = vmatprep.subr.mxu0 0.0
    %v747 = vand.u32 %v559, 4294901760
    %v748 = vsub.f32 %v559, %v747
    %v749 = vand.u32 %v748, 4294901760
    %v750 = vsub.f32 %v748, %v749
    %v751 = vand.u32 %v750, 4294901760
    %752 = vmatpush1.msra.mxu0 %v751
    %753 = vmatprep.subr.mxu0 0.0
    %v754 = vand.u32 %v558, 4294901760
    %v755 = vsub.f32 %v558, %v754
    %v756 = vand.u32 %v755, 4294901760
    %v757 = vsub.f32 %v755, %v756
    %v758 = vand.u32 %v757, 4294901760
    %759 = vmatpush1.msra.mxu0 %v758
    %760 = vmatprep.subr.mxu0 0.0
    %v761 = vand.u32 %v557, 4294901760
    %v762 = vsub.f32 %v557, %v761
    %v763 = vand.u32 %v762, 4294901760
    %v764 = vsub.f32 %v762, %v763
    %v765 = vand.u32 %v764, 4294901760
    %766 = vmatpush1.msra.mxu0 %v765
    %767 = vmatprep.subr.mxu0 0.0
    %v768 = vand.u32 %v556, 4294901760
    %v769 = vsub.f32 %v556, %v768
    %v770 = vand.u32 %v769, 4294901760
    %v771 = vsub.f32 %v769, %v770
    %v772 = vand.u32 %v771, 4294901760
    %773 = vmatpush1.msra.mxu0 %v772
    %774 = vmatprep.subr.mxu0 0.0
    %v775 = vand.u32 %v555, 4294901760
    %v776 = vsub.f32 %v555, %v775
    %v777 = vand.u32 %v776, 4294901760
    %v778 = vsub.f32 %v776, %v777
    %v779 = vand.u32 %v778, 4294901760
    %780 = vmatpush1.msra.mxu0 %v779
    %781 = vmatprep.subr.mxu0 0.0
    %782 = vmatpush2.msra.mxu0 0.0
    %783 = vmatprep.subr.mxu0 0.0
    %784 = vmatpush2.msra.mxu0 0.0
    %785 = vmatprep.subr.mxu0 0.0
    %786 = vmatpush2.msra.mxu0 0.0
    %787 = vmatprep.subr.mxu0 0.0
    %788 = vmatpush2.msra.mxu0 0.0
    %789 = vmatprep.subr.mxu0 0.0
    %790 = vmatpush2.msra.mxu0 0.0
    %791 = vmatprep.subr.mxu0 0.0
    %792 = vmatpush2.msra.mxu0 0.0
    %793 = vmatprep.subr.mxu0 0.0
    %794 = vmatpush2.msra.mxu0 0.0
    %795 = vmatprep.subr.mxu0 0.0
    %796 = vmatpush2.msra.mxu0 0.0
    %797 = vmatprep.subr.mxu0 0.0
    %798 = vmatpush2.msra.mxu0 0.0
    %799 = vmatprep.subr.mxu0 0.0
    %800 = vmatpush2.msra.mxu0 0.0
    %801 = vmatprep.subr.mxu0 0.0
    %802 = vmatpush2.msra.mxu0 0.0
    %803 = vmatprep.subr.mxu0 0.0
    %804 = vmatpush2.msra.mxu0 0.0
    %805 = vmatprep.subr.mxu0 0.0
    %806 = vmatpush2.msra.mxu0 0.0
    %807 = vmatprep.subr.mxu0 0.0
    %808 = vmatpush2.msra.mxu0 0.0
    %809 = vmatprep.subr.mxu0 0.0
    %810 = vmatpush2.msra.mxu0 0.0
    %811 = vmatprep.subr.mxu0 0.0
    %812 = vmatpush2.msra.mxu0 0.0
    %813 = vmatprep.mubr.f32.mxu0 0.0
    %v814 = vand.u32 %v554, 4294901760
    %815 = vmatmul.mubr.f32.gmra.mxu0 %v814
    %v816 = vpop.f32.mrf.mxu0
    %v817 = vadd.f32 %v666, %v816
    %v818 = vpop.f32.mrf.mxu0
    %819 = vdwg.mxu0
    %820 = vmatprep.subr.mxu0 0.0
    %v821 = vand.u32 %v570, 4294901760
    %v822 = vsub.f32 %v570, %v821
    %823 = vmatpush1.msra.mxu0 %v822
    %824 = vmatprep.subr.mxu0 0.0
    %v825 = vand.u32 %v569, 4294901760
    %v826 = vsub.f32 %v569, %v825
    %827 = vmatpush1.msra.mxu0 %v826
    %828 = vmatprep.subr.mxu0 0.0
    %v829 = vand.u32 %v568, 4294901760
    %v830 = vsub.f32 %v568, %v829
    %831 = vmatpush1.msra.mxu0 %v830
    %832 = vmatprep.subr.mxu0 0.0
    %v833 = vand.u32 %v567, 4294901760
    %v834 = vsub.f32 %v567, %v833
    %835 = vmatpush1.msra.mxu0 %v834
    %836 = vmatprep.subr.mxu0 0.0
    %v837 = vand.u32 %v566, 4294901760
    %v838 = vsub.f32 %v566, %v837
    %839 = vmatpush1.msra.mxu0 %v838
    %840 = vmatprep.subr.mxu0 0.0
    %v841 = vand.u32 %v565, 4294901760
    %v842 = vsub.f32 %v565, %v841
    %843 = vmatpush1.msra.mxu0 %v842
    %844 = vmatprep.subr.mxu0 0.0
    %v845 = vand.u32 %v564, 4294901760
    %v846 = vsub.f32 %v564, %v845
    %847 = vmatpush1.msra.mxu0 %v846
    %848 = vmatprep.subr.mxu0 0.0
    %v849 = vand.u32 %v563, 4294901760
    %v850 = vsub.f32 %v563, %v849
    %851 = vmatpush1.msra.mxu0 %v850
    %852 = vmatprep.subr.mxu0 0.0
    %v853 = vand.u32 %v562, 4294901760
    %v854 = vsub.f32 %v562, %v853
    %855 = vmatpush1.msra.mxu0 %v854
    %856 = vmatprep.subr.mxu0 0.0
    %v857 = vand.u32 %v561, 4294901760
    %v858 = vsub.f32 %v561, %v857
    %859 = vmatpush1.msra.mxu0 %v858
    %860 = vmatprep.subr.mxu0 0.0
    %v861 = vand.u32 %v560, 4294901760
    %v862 = vsub.f32 %v560, %v861
    %863 = vmatpush1.msra.mxu0 %v862
    %864 = vmatprep.subr.mxu0 0.0
    %v865 = vand.u32 %v559, 4294901760
    %v866 = vsub.f32 %v559, %v865
    %867 = vmatpush1.msra.mxu0 %v866
    %868 = vmatprep.subr.mxu0 0.0
    %v869 = vand.u32 %v558, 4294901760
    %v870 = vsub.f32 %v558, %v869
    %871 = vmatpush1.msra.mxu0 %v870
    %872 = vmatprep.subr.mxu0 0.0
    %v873 = vand.u32 %v557, 4294901760
    %v874 = vsub.f32 %v557, %v873
    %875 = vmatpush1.msra.mxu0 %v874
    %876 = vmatprep.subr.mxu0 0.0
    %v877 = vand.u32 %v556, 4294901760
    %v878 = vsub.f32 %v556, %v877
    %879 = vmatpush1.msra.mxu0 %v878
    %880 = vmatprep.subr.mxu0 0.0
    %v881 = vand.u32 %v555, 4294901760
    %v882 = vsub.f32 %v555, %v881
    %883 = vmatpush1.msra.mxu0 %v882
    %884 = vmatprep.subr.mxu0 0.0
    %885 = vmatpush2.msra.mxu0 0.0
    %886 = vmatprep.subr.mxu0 0.0
    %887 = vmatpush2.msra.mxu0 0.0
    %888 = vmatprep.subr.mxu0 0.0
    %889 = vmatpush2.msra.mxu0 0.0
    %890 = vmatprep.subr.mxu0 0.0
    %891 = vmatpush2.msra.mxu0 0.0
    %892 = vmatprep.subr.mxu0 0.0
    %893 = vmatpush2.msra.mxu0 0.0
    %894 = vmatprep.subr.mxu0 0.0
    %895 = vmatpush2.msra.mxu0 0.0
    %896 = vmatprep.subr.mxu0 0.0
    %897 = vmatpush2.msra.mxu0 0.0
    %898 = vmatprep.subr.mxu0 0.0
    %899 = vmatpush2.msra.mxu0 0.0
    %900 = vmatprep.subr.mxu0 0.0
    %901 = vmatpush2.msra.mxu0 0.0
    %902 = vmatprep.subr.mxu0 0.0
    %903 = vmatpush2.msra.mxu0 0.0
    %904 = vmatprep.subr.mxu0 0.0
    %905 = vmatpush2.msra.mxu0 0.0
    %906 = vmatprep.subr.mxu0 0.0
    %907 = vmatpush2.msra.mxu0 0.0
    %908 = vmatprep.subr.mxu0 0.0
    %909 = vmatpush2.msra.mxu0 0.0
    %910 = vmatprep.subr.mxu0 0.0
    %911 = vmatpush2.msra.mxu0 0.0
    %912 = vmatprep.subr.mxu0 0.0
    %913 = vmatpush2.msra.mxu0 0.0
    %914 = vmatprep.subr.mxu0 0.0
    %915 = vmatpush2.msra.mxu0 0.0
    %916 = vmatprep.mubr.f32.mxu0 0.0
    %v917 = vand.u32 %v554, 4294901760
    %v918 = vsub.f32 %v554, %v917
    %919 = vmatmul.mubr.f32.gmra.mxu0 %v918
    %v920 = vpop.f32.mrf.mxu0
    %v921 = vadd.f32 %v817, %v920
    %v922 = vpop.f32.mrf.mxu0
    %923 = vdwg.mxu0
    %924 = vmatprep.subr.mxu0 0.0
    %v925 = vand.u32 %v570, 4294901760
    %926 = vmatpush1.msra.mxu0 %v925
    %927 = vmatprep.subr.mxu0 0.0
    %v928 = vand.u32 %v569, 4294901760
    %929 = vmatpush1.msra.mxu0 %v928
    %930 = vmatprep.subr.mxu0 0.0
    %v931 = vand.u32 %v568, 4294901760
    %932 = vmatpush1.msra.mxu0 %v931
    %933 = vmatprep.subr.mxu0 0.0
    %v934 = vand.u32 %v567, 4294901760
    %935 = vmatpush1.msra.mxu0 %v934
    %936 = vmatprep.subr.mxu0 0.0
    %v937 = vand.u32 %v566, 4294901760
    %938 = vmatpush1.msra.mxu0 %v937
    %939 = vmatprep.subr.mxu0 0.0
    %v940 = vand.u32 %v565, 4294901760
    %941 = vmatpush1.msra.mxu0 %v940
    %942 = vmatprep.subr.mxu0 0.0
    %v943 = vand.u32 %v564, 4294901760
    %944 = vmatpush1.msra.mxu0 %v943
    %945 = vmatprep.subr.mxu0 0.0
    %v946 = vand.u32 %v563, 4294901760
    %947 = vmatpush1.msra.mxu0 %v946
    %948 = vmatprep.subr.mxu0 0.0
    %v949 = vand.u32 %v562, 4294901760
    %950 = vmatpush1.msra.mxu0 %v949
    %951 = vmatprep.subr.mxu0 0.0
    %v952 = vand.u32 %v561, 4294901760
    %953 = vmatpush1.msra.mxu0 %v952
    %954 = vmatprep.subr.mxu0 0.0
    %v955 = vand.u32 %v560, 4294901760
    %956 = vmatpush1.msra.mxu0 %v955
    %957 = vmatprep.subr.mxu0 0.0
    %v958 = vand.u32 %v559, 4294901760
    %959 = vmatpush1.msra.mxu0 %v958
    %960 = vmatprep.subr.mxu0 0.0
    %v961 = vand.u32 %v558, 4294901760
    %962 = vmatpush1.msra.mxu0 %v961
    %963 = vmatprep.subr.mxu0 0.0
    %v964 = vand.u32 %v557, 4294901760
    %965 = vmatpush1.msra.mxu0 %v964
    %966 = vmatprep.subr.mxu0 0.0
    %v967 = vand.u32 %v556, 4294901760
    %968 = vmatpush1.msra.mxu0 %v967
    %969 = vmatprep.subr.mxu0 0.0
    %v970 = vand.u32 %v555, 4294901760
    %971 = vmatpush1.msra.mxu0 %v970
    %972 = vmatprep.subr.mxu0 0.0
    %973 = vmatpush2.msra.mxu0 0.0
    %974 = vmatprep.subr.mxu0 0.0
    %975 = vmatpush2.msra.mxu0 0.0
    %976 = vmatprep.subr.mxu0 0.0
    %977 = vmatpush2.msra.mxu0 0.0
    %978 = vmatprep.subr.mxu0 0.0
    %979 = vmatpush2.msra.mxu0 0.0
    %980 = vmatprep.subr.mxu0 0.0
    %981 = vmatpush2.msra.mxu0 0.0
    %982 = vmatprep.subr.mxu0 0.0
    %983 = vmatpush2.msra.mxu0 0.0
    %984 = vmatprep.subr.mxu0 0.0
    %985 = vmatpush2.msra.mxu0 0.0
    %986 = vmatprep.subr.mxu0 0.0
    %987 = vmatpush2.msra.mxu0 0.0
    %988 = vmatprep.subr.mxu0 0.0
    %989 = vmatpush2.msra.mxu0 0.0
    %990 = vmatprep.subr.mxu0 0.0
    %991 = vmatpush2.msra.mxu0 0.0
    %992 = vmatprep.subr.mxu0 0.0
    %993 = vmatpush2.msra.mxu0 0.0
    %994 = vmatprep.subr.mxu0 0.0
    %995 = vmatpush2.msra.mxu0 0.0
    %996 = vmatprep.subr.mxu0 0.0
    %997 = vmatpush2.msra.mxu0 0.0
    %998 = vmatprep.subr.mxu0 0.0
    %999 = vmatpush2.msra.mxu0 0.0
    %1000 = vmatprep.subr.mxu0 0.0
    %1001 = vmatpush2.msra.mxu0 0.0
    %1002 = vmatprep.subr.mxu0 0.0
    %1003 = vmatpush2.msra.mxu0 0.0
    %1004 = vmatprep.mubr.f32.mxu0 0.0
    %v1005 = vand.u32 %v554, 4294901760
    %v1006 = vsub.f32 %v554, %v1005
    %v1007 = vand.u32 %v1006, 4294901760
    %1008 = vmatmul.mubr.f32.gmra.mxu0 %v1007
    %v1009 = vpop.f32.mrf.mxu0
    %v1010 = vadd.f32 %v921, %v1009
    %v1011 = vpop.f32.mrf.mxu0
    %1012 = vdwg.mxu0
    %1013 = vmatprep.subr.mxu0 0.0
    %v1014 = vand.u32 %v570, 4294901760
    %v1015 = vsub.f32 %v570, %v1014
    %v1016 = vand.u32 %v1015, 4294901760
    %1017 = vmatpush1.msra.mxu0 %v1016
    %1018 = vmatprep.subr.mxu0 0.0
    %v1019 = vand.u32 %v569, 4294901760
    %v1020 = vsub.f32 %v569, %v1019
    %v1021 = vand.u32 %v1020, 4294901760
    %1022 = vmatpush1.msra.mxu0 %v1021
    %1023 = vmatprep.subr.mxu0 0.0
    %v1024 = vand.u32 %v568, 4294901760
    %v1025 = vsub.f32 %v568, %v1024
    %v1026 = vand.u32 %v1025, 4294901760
    %1027 = vmatpush1.msra.mxu0 %v1026
    %1028 = vmatprep.subr.mxu0 0.0
    %v1029 = vand.u32 %v567, 4294901760
    %v1030 = vsub.f32 %v567, %v1029
    %v1031 = vand.u32 %v1030, 4294901760
    %1032 = vmatpush1.msra.mxu0 %v1031
    %1033 = vmatprep.subr.mxu0 0.0
    %v1034 = vand.u32 %v566, 4294901760
    %v1035 = vsub.f32 %v566, %v1034
    %v1036 = vand.u32 %v1035, 4294901760
    %1037 = vmatpush1.msra.mxu0 %v1036
    %1038 = vmatprep.subr.mxu0 0.0
    %v1039 = vand.u32 %v565, 4294901760
    %v1040 = vsub.f32 %v565, %v1039
    %v1041 = vand.u32 %v1040, 4294901760
    %1042 = vmatpush1.msra.mxu0 %v1041
    %1043 = vmatprep.subr.mxu0 0.0
    %v1044 = vand.u32 %v564, 4294901760
    %v1045 = vsub.f32 %v564, %v1044
    %v1046 = vand.u32 %v1045, 4294901760
    %1047 = vmatpush1.msra.mxu0 %v1046
    %1048 = vmatprep.subr.mxu0 0.0
    %v1049 = vand.u32 %v563, 4294901760
    %v1050 = vsub.f32 %v563, %v1049
    %v1051 = vand.u32 %v1050, 4294901760
    %1052 = vmatpush1.msra.mxu0 %v1051
    %1053 = vmatprep.subr.mxu0 0.0
    %v1054 = vand.u32 %v562, 4294901760
    %v1055 = vsub.f32 %v562, %v1054
    %v1056 = vand.u32 %v1055, 4294901760
    %1057 = vmatpush1.msra.mxu0 %v1056
    %1058 = vmatprep.subr.mxu0 0.0
    %v1059 = vand.u32 %v561, 4294901760
    %v1060 = vsub.f32 %v561, %v1059
    %v1061 = vand.u32 %v1060, 4294901760
    %1062 = vmatpush1.msra.mxu0 %v1061
    %1063 = vmatprep.subr.mxu0 0.0
    %v1064 = vand.u32 %v560, 4294901760
    %v1065 = vsub.f32 %v560, %v1064
    %v1066 = vand.u32 %v1065, 4294901760
    %1067 = vmatpush1.msra.mxu0 %v1066
    %1068 = vmatprep.subr.mxu0 0.0
    %v1069 = vand.u32 %v559, 4294901760
    %v1070 = vsub.f32 %v559, %v1069
    %v1071 = vand.u32 %v1070, 4294901760
    %1072 = vmatpush1.msra.mxu0 %v1071
    %1073 = vmatprep.subr.mxu0 0.0
    %v1074 = vand.u32 %v558, 4294901760
    %v1075 = vsub.f32 %v558, %v1074
    %v1076 = vand.u32 %v1075, 4294901760
    %1077 = vmatpush1.msra.mxu0 %v1076
    %1078 = vmatprep.subr.mxu0 0.0
    %v1079 = vand.u32 %v557, 4294901760
    %v1080 = vsub.f32 %v557, %v1079
    %v1081 = vand.u32 %v1080, 4294901760
    %1082 = vmatpush1.msra.mxu0 %v1081
    %1083 = vmatprep.subr.mxu0 0.0
    %v1084 = vand.u32 %v556, 4294901760
    %v1085 = vsub.f32 %v556, %v1084
    %v1086 = vand.u32 %v1085, 4294901760
    %1087 = vmatpush1.msra.mxu0 %v1086
    %1088 = vmatprep.subr.mxu0 0.0
    %v1089 = vand.u32 %v555, 4294901760
    %v1090 = vsub.f32 %v555, %v1089
    %v1091 = vand.u32 %v1090, 4294901760
    %1092 = vmatpush1.msra.mxu0 %v1091
    %1093 = vmatprep.subr.mxu0 0.0
    %1094 = vmatpush2.msra.mxu0 0.0
    %1095 = vmatprep.subr.mxu0 0.0
    %1096 = vmatpush2.msra.mxu0 0.0
    %1097 = vmatprep.subr.mxu0 0.0
    %1098 = vmatpush2.msra.mxu0 0.0
    %1099 = vmatprep.subr.mxu0 0.0
    %1100 = vmatpush2.msra.mxu0 0.0
    %1101 = vmatprep.subr.mxu0 0.0
    %1102 = vmatpush2.msra.mxu0 0.0
    %1103 = vmatprep.subr.mxu0 0.0
    %1104 = vmatpush2.msra.mxu0 0.0
    %1105 = vmatprep.subr.mxu0 0.0
    %1106 = vmatpush2.msra.mxu0 0.0
    %1107 = vmatprep.subr.mxu0 0.0
    %1108 = vmatpush2.msra.mxu0 0.0
    %1109 = vmatprep.subr.mxu0 0.0
    %1110 = vmatpush2.msra.mxu0 0.0
    %1111 = vmatprep.subr.mxu0 0.0
    %1112 = vmatpush2.msra.mxu0 0.0
    %1113 = vmatprep.subr.mxu0 0.0
    %1114 = vmatpush2.msra.mxu0 0.0
    %1115 = vmatprep.subr.mxu0 0.0
    %1116 = vmatpush2.msra.mxu0 0.0
    %1117 = vmatprep.subr.mxu0 0.0
    %1118 = vmatpush2.msra.mxu0 0.0
    %1119 = vmatprep.subr.mxu0 0.0
    %1120 = vmatpush2.msra.mxu0 0.0
    %1121 = vmatprep.subr.mxu0 0.0
    %1122 = vmatpush2.msra.mxu0 0.0
    %1123 = vmatprep.subr.mxu0 0.0
    %1124 = vmatpush2.msra.mxu0 0.0
    %1125 = vmatprep.mubr.f32.mxu0 0.0
    %v1126 = vand.u32 %v554, 4294901760
    %1127 = vmatmul.mubr.f32.gmra.mxu0 %v1126
    %v1128 = vpop.f32.mrf.mxu0
    %v1129 = vadd.f32 %v1010, %v1128
    %v1130 = vpop.f32.mrf.mxu0
    %1131 = vdwg.mxu0
    %1132 = vmatprep.subr.mxu0 0.0
    %v1133 = vand.u32 %v570, 4294901760
    %1134 = vmatpush1.msra.mxu0 %v1133
    %1135 = vmatprep.subr.mxu0 0.0
    %v1136 = vand.u32 %v569, 4294901760
    %1137 = vmatpush1.msra.mxu0 %v1136
    %1138 = vmatprep.subr.mxu0 0.0
    %v1139 = vand.u32 %v568, 4294901760
    %1140 = vmatpush1.msra.mxu0 %v1139
    %1141 = vmatprep.subr.mxu0 0.0
    %v1142 = vand.u32 %v567, 4294901760
    %1143 = vmatpush1.msra.mxu0 %v1142
    %1144 = vmatprep.subr.mxu0 0.0
    %v1145 = vand.u32 %v566, 4294901760
    %1146 = vmatpush1.msra.mxu0 %v1145
    %1147 = vmatprep.subr.mxu0 0.0
    %v1148 = vand.u32 %v565, 4294901760
    %1149 = vmatpush1.msra.mxu0 %v1148
    %1150 = vmatprep.subr.mxu0 0.0
    %v1151 = vand.u32 %v564, 4294901760
    %1152 = vmatpush1.msra.mxu0 %v1151
    %1153 = vmatprep.subr.mxu0 0.0
    %v1154 = vand.u32 %v563, 4294901760
    %1155 = vmatpush1.msra.mxu0 %v1154
    %1156 = vmatprep.subr.mxu0 0.0
    %v1157 = vand.u32 %v562, 4294901760
    %1158 = vmatpush1.msra.mxu0 %v1157
    %1159 = vmatprep.subr.mxu0 0.0
    %v1160 = vand.u32 %v561, 4294901760
    %1161 = vmatpush1.msra.mxu0 %v1160
    %1162 = vmatprep.subr.mxu0 0.0
    %v1163 = vand.u32 %v560, 4294901760
    %1164 = vmatpush1.msra.mxu0 %v1163
    %1165 = vmatprep.subr.mxu0 0.0
    %v1166 = vand.u32 %v559, 4294901760
    %1167 = vmatpush1.msra.mxu0 %v1166
    %1168 = vmatprep.subr.mxu0 0.0
    %v1169 = vand.u32 %v558, 4294901760
    %1170 = vmatpush1.msra.mxu0 %v1169
    %1171 = vmatprep.subr.mxu0 0.0
    %v1172 = vand.u32 %v557, 4294901760
    %1173 = vmatpush1.msra.mxu0 %v1172
    %1174 = vmatprep.subr.mxu0 0.0
    %v1175 = vand.u32 %v556, 4294901760
    %1176 = vmatpush1.msra.mxu0 %v1175
    %1177 = vmatprep.subr.mxu0 0.0
    %v1178 = vand.u32 %v555, 4294901760
    %1179 = vmatpush1.msra.mxu0 %v1178
    %1180 = vmatprep.subr.mxu0 0.0
    %1181 = vmatpush2.msra.mxu0 0.0
    %1182 = vmatprep.subr.mxu0 0.0
    %1183 = vmatpush2.msra.mxu0 0.0
    %1184 = vmatprep.subr.mxu0 0.0
    %1185 = vmatpush2.msra.mxu0 0.0
    %1186 = vmatprep.subr.mxu0 0.0
    %1187 = vmatpush2.msra.mxu0 0.0
    %1188 = vmatprep.subr.mxu0 0.0
    %1189 = vmatpush2.msra.mxu0 0.0
    %1190 = vmatprep.subr.mxu0 0.0
    %1191 = vmatpush2.msra.mxu0 0.0
    %1192 = vmatprep.subr.mxu0 0.0
    %1193 = vmatpush2.msra.mxu0 0.0
    %1194 = vmatprep.subr.mxu0 0.0
    %1195 = vmatpush2.msra.mxu0 0.0
    %1196 = vmatprep.subr.mxu0 0.0
    %1197 = vmatpush2.msra.mxu0 0.0
    %1198 = vmatprep.subr.mxu0 0.0
    %1199 = vmatpush2.msra.mxu0 0.0
    %1200 = vmatprep.subr.mxu0 0.0
    %1201 = vmatpush2.msra.mxu0 0.0
    %1202 = vmatprep.subr.mxu0 0.0
    %1203 = vmatpush2.msra.mxu0 0.0
    %1204 = vmatprep.subr.mxu0 0.0
    %1205 = vmatpush2.msra.mxu0 0.0
    %1206 = vmatprep.subr.mxu0 0.0
    %1207 = vmatpush2.msra.mxu0 0.0
    %1208 = vmatprep.subr.mxu0 0.0
    %1209 = vmatpush2.msra.mxu0 0.0
    %1210 = vmatprep.subr.mxu0 0.0
    %1211 = vmatpush2.msra.mxu0 0.0
    %1212 = vmatprep.mubr.f32.mxu0 0.0
    %v1213 = vand.u32 %v554, 4294901760
    %1214 = vmatmul.mubr.f32.gmra.mxu0 %v1213
    %v1215 = vpop.f32.mrf.mxu0
    %v1216 = vadd.f32 %v1129, %v1215
    %v1217 = vpop.f32.mrf.mxu0
    %1218 = vdwg.mxu0
    %v1219 = vmax.f32 %v1216, 0.0
    %v1220 = vld [vmem:[%s5] sm:$0xff]
    %v1221 = vld [vmem:[%s5 + $0x8] sm:$0xff]
    %v1222 = vld [vmem:[%s5 + $0x10] sm:$0xff]
    %v1223 = vld [vmem:[%s5 + $0x18] sm:$0xff]
    %v1224 = vld [vmem:[%s5 + $0x20] sm:$0xff]
    %v1225 = vld [vmem:[%s5 + $0x28] sm:$0xff]
    %v1226 = vld [vmem:[%s5 + $0x30] sm:$0xff]
    %v1227 = vld [vmem:[%s5 + $0x38] sm:$0xff]
    %v1228 = vld [vmem:[%s5 + $0x40] sm:$0xff]
    %v1229 = vld [vmem:[%s5 + $0x48] sm:$0xff]
    %v1230 = vld [vmem:[%s5 + $0x50] sm:$0xff]
    %v1231 = vld [vmem:[%s5 + $0x58] sm:$0xff]
    %v1232 = vld [vmem:[%s5 + $0x60] sm:$0xff]
    %v1233 = vld [vmem:[%s5 + $0x68] sm:$0xff]
    %v1234 = vld [vmem:[%s5 + $0x70] sm:$0xff]
    %v1235 = vld [vmem:[%s5 + $0x78] sm:$0xff]
    %v1236 = vld [vmem:[%s6] sm:$0x1]
    %v1238 = vlaneseq
    %v1239 = vshrl.u32 %v1238, 7
    %v1240 = vsub.s32 0, %v1239
    %v1241 = vrot.slane %v1236, %v1240
    %1243 = vmatprep.subr.mxu0 0.0
    %v1244 = vand.u32 %v1235, 4294901760
    %1245 = vmatpush1.msra.mxu0 %v1244
    %1246 = vmatprep.subr.mxu0 0.0
    %v1247 = vand.u32 %v1234, 4294901760
    %1248 = vmatpush1.msra.mxu0 %v1247
    %1249 = vmatprep.subr.mxu0 0.0
    %v1250 = vand.u32 %v1233, 4294901760
    %1251 = vmatpush1.msra.mxu0 %v1250
    %1252 = vmatprep.subr.mxu0 0.0
    %v1253 = vand.u32 %v1232, 4294901760
    %1254 = vmatpush1.msra.mxu0 %v1253
    %1255 = vmatprep.subr.mxu0 0.0
    %v1256 = vand.u32 %v1231, 4294901760
    %1257 = vmatpush1.msra.mxu0 %v1256
    %1258 = vmatprep.subr.mxu0 0.0
    %v1259 = vand.u32 %v1230, 4294901760
    %1260 = vmatpush1.msra.mxu0 %v1259
    %1261 = vmatprep.subr.mxu0 0.0
    %v1262 = vand.u32 %v1229, 4294901760
    %1263 = vmatpush1.msra.mxu0 %v1262
    %1264 = vmatprep.subr.mxu0 0.0
    %v1265 = vand.u32 %v1228, 4294901760
    %1266 = vmatpush1.msra.mxu0 %v1265
    %1267 = vmatprep.subr.mxu0 0.0
    %v1268 = vand.u32 %v1227, 4294901760
    %1269 = vmatpush1.msra.mxu0 %v1268
    %1270 = vmatprep.subr.mxu0 0.0
    %v1271 = vand.u32 %v1226, 4294901760
    %1272 = vmatpush1.msra.mxu0 %v1271
    %1273 = vmatprep.subr.mxu0 0.0
    %v1274 = vand.u32 %v1225, 4294901760
    %1275 = vmatpush1.msra.mxu0 %v1274
    %1276 = vmatprep.subr.mxu0 0.0
    %v1277 = vand.u32 %v1224, 4294901760
    %1278 = vmatpush1.msra.mxu0 %v1277
    %1279 = vmatprep.subr.mxu0 0.0
    %v1280 = vand.u32 %v1223, 4294901760
    %1281 = vmatpush1.msra.mxu0 %v1280
    %1282 = vmatprep.subr.mxu0 0.0
    %v1283 = vand.u32 %v1222, 4294901760
    %1284 = vmatpush1.msra.mxu0 %v1283
    %1285 = vmatprep.subr.mxu0 0.0
    %v1286 = vand.u32 %v1221, 4294901760
    %1287 = vmatpush1.msra.mxu0 %v1286
    %1288 = vmatprep.subr.mxu0 0.0
    %v1289 = vand.u32 %v1220, 4294901760
    %1290 = vmatpush1.msra.mxu0 %v1289
    %1291 = vmatprep.subr.mxu0 0.0
    %1292 = vmatpush2.msra.mxu0 0.0
    %1293 = vmatprep.subr.mxu0 0.0
    %1294 = vmatpush2.msra.mxu0 0.0
    %1295 = vmatprep.subr.mxu0 0.0
    %1296 = vmatpush2.msra.mxu0 0.0
    %1297 = vmatprep.subr.mxu0 0.0
    %1298 = vmatpush2.msra.mxu0 0.0
    %1299 = vmatprep.subr.mxu0 0.0
    %1300 = vmatpush2.msra.mxu0 0.0
    %1301 = vmatprep.subr.mxu0 0.0
    %1302 = vmatpush2.msra.mxu0 0.0
    %1303 = vmatprep.subr.mxu0 0.0
    %1304 = vmatpush2.msra.mxu0 0.0
    %1305 = vmatprep.subr.mxu0 0.0
    %1306 = vmatpush2.msra.mxu0 0.0
    %1307 = vmatprep.subr.mxu0 0.0
    %1308 = vmatpush2.msra.mxu0 0.0
    %1309 = vmatprep.subr.mxu0 0.0
    %1310 = vmatpush2.msra.mxu0 0.0
    %1311 = vmatprep.subr.mxu0 0.0
    %1312 = vmatpush2.msra.mxu0 0.0
    %1313 = vmatprep.subr.mxu0 0.0
    %1314 = vmatpush2.msra.mxu0 0.0
    %1315 = vmatprep.subr.mxu0 0.0
    %1316 = vmatpush2.msra.mxu0 0.0
    %1317 = vmatprep.subr.mxu0 0.0
    %1318 = vmatpush2.msra.mxu0 0.0
    %1319 = vmatprep.subr.mxu0 0.0
    %1320 = vmatpush2.msra.mxu0 0.0
    %1321 = vmatprep.subr.mxu0 0.0
    %1322 = vmatpush2.msra.mxu0 0.0
    %1323 = vmatprep.mubr.f32.mxu0 0.0
    %v1324 = vand.u32 %v1219, 4294901760
    %v1325 = vsub.f32 %v1219, %v1324
    %v1326 = vand.u32 %v1325, 4294901760
    %v1327 = vsub.f32 %v1325, %v1326
    %v1328 = vand.u32 %v1327, 4294901760
    %1329 = vmatmul.mubr.f32.gmra.mxu0 %v1328
    %v1330 = vpop.f32.mrf.mxu0
    %v1331 = vadd.f32 %v1241, %v1330
    %v1332 = vpop.f32.mrf.mxu0
    %1333 = vdwg.mxu0
    %1334 = vmatprep.subr.mxu0 0.0
    %v1335 = vand.u32 %v1235, 4294901760
    %v1336 = vsub.f32 %v1235, %v1335
    %v1337 = vand.u32 %v1336, 4294901760
    %v1338 = vsub.f32 %v1336, %v1337
    %v1339 = vand.u32 %v1338, 4294901760
    %1340 = vmatpush1.msra.mxu0 %v1339
    %1341 = vmatprep.subr.mxu0 0.0
    %v1342 = vand.u32 %v1234, 4294901760
    %v1343 = vsub.f32 %v1234, %v1342
    %v1344 = vand.u32 %v1343, 4294901760
    %v1345 = vsub.f32 %v1343, %v1344
    %v1346 = vand.u32 %v1345, 4294901760
    %1347 = vmatpush1.msra.mxu0 %v1346
    %1348 = vmatprep.subr.mxu0 0.0
    %v1349 = vand.u32 %v1233, 4294901760
    %v1350 = vsub.f32 %v1233, %v1349
    %v1351 = vand.u32 %v1350, 4294901760
    %v1352 = vsub.f32 %v1350, %v1351
    %v1353 = vand.u32 %v1352, 4294901760
    %1354 = vmatpush1.msra.mxu0 %v1353
    %1355 = vmatprep.subr.mxu0 0.0
    %v1356 = vand.u32 %v1232, 4294901760
    %v1357 = vsub.f32 %v1232, %v1356
    %v1358 = vand.u32 %v1357, 4294901760
    %v1359 = vsub.f32 %v1357, %v1358
    %v1360 = vand.u32 %v1359, 4294901760
    %1361 = vmatpush1.msra.mxu0 %v1360
    %1362 = vmatprep.subr.mxu0 0.0
    %v1363 = vand.u32 %v1231, 4294901760
    %v1364 = vsub.f32 %v1231, %v1363
    %v1365 = vand.u32 %v1364, 4294901760
    %v1366 = vsub.f32 %v1364, %v1365
    %v1367 = vand.u32 %v1366, 4294901760
    %1368 = vmatpush1.msra.mxu0 %v1367
    %1369 = vmatprep.subr.mxu0 0.0
    %v1370 = vand.u32 %v1230, 4294901760
    %v1371 = vsub.f32 %v1230, %v1370
    %v1372 = vand.u32 %v1371, 4294901760
    %v1373 = vsub.f32 %v1371, %v1372
    %v1374 = vand.u32 %v1373, 4294901760
    %1375 = vmatpush1.msra.mxu0 %v1374
    %1376 = vmatprep.subr.mxu0 0.0
    %v1377 = vand.u32 %v1229, 4294901760
    %v1378 = vsub.f32 %v1229, %v1377
    %v1379 = vand.u32 %v1378, 4294901760
    %v1380 = vsub.f32 %v1378, %v1379
    %v1381 = vand.u32 %v1380, 4294901760
    %1382 = vmatpush1.msra.mxu0 %v1381
    %1383 = vmatprep.subr.mxu0 0.0
    %v1384 = vand.u32 %v1228, 4294901760
    %v1385 = vsub.f32 %v1228, %v1384
    %v1386 = vand.u32 %v1385, 4294901760
    %v1387 = vsub.f32 %v1385, %v1386
    %v1388 = vand.u32 %v1387, 4294901760
    %1389 = vmatpush1.msra.mxu0 %v1388
    %1390 = vmatprep.subr.mxu0 0.0
    %v1391 = vand.u32 %v1227, 4294901760
    %v1392 = vsub.f32 %v1227, %v1391
    %v1393 = vand.u32 %v1392, 4294901760
    %v1394 = vsub.f32 %v1392, %v1393
    %v1395 = vand.u32 %v1394, 4294901760
    %1396 = vmatpush1.msra.mxu0 %v1395
    %1397 = vmatprep.subr.mxu0 0.0
    %v1398 = vand.u32 %v1226, 4294901760
    %v1399 = vsub.f32 %v1226, %v1398
    %v1400 = vand.u32 %v1399, 4294901760
    %v1401 = vsub.f32 %v1399, %v1400
    %v1402 = vand.u32 %v1401, 4294901760
    %1403 = vmatpush1.msra.mxu0 %v1402
    %1404 = vmatprep.subr.mxu0 0.0
    %v1405 = vand.u32 %v1225, 4294901760
    %v1406 = vsub.f32 %v1225, %v1405
    %v1407 = vand.u32 %v1406, 4294901760
    %v1408 = vsub.f32 %v1406, %v1407
    %v1409 = vand.u32 %v1408, 4294901760
    %1410 = vmatpush1.msra.mxu0 %v1409
    %1411 = vmatprep.subr.mxu0 0.0
    %v1412 = vand.u32 %v1224, 4294901760
    %v1413 = vsub.f32 %v1224, %v1412
    %v1414 = vand.u32 %v1413, 4294901760
    %v1415 = vsub.f32 %v1413, %v1414
    %v1416 = vand.u32 %v1415, 4294901760
    %1417 = vmatpush1.msra.mxu0 %v1416
    %1418 = vmatprep.subr.mxu0 0.0
    %v1419 = vand.u32 %v1223, 4294901760
    %v1420 = vsub.f32 %v1223, %v1419
    %v1421 = vand.u32 %v1420, 4294901760
    %v1422 = vsub.f32 %v1420, %v1421
    %v1423 = vand.u32 %v1422, 4294901760
    %1424 = vmatpush1.msra.mxu0 %v1423
    %1425 = vmatprep.subr.mxu0 0.0
    %v1426 = vand.u32 %v1222, 4294901760
    %v1427 = vsub.f32 %v1222, %v1426
    %v1428 = vand.u32 %v1427, 4294901760
    %v1429 = vsub.f32 %v1427, %v1428
    %v1430 = vand.u32 %v1429, 4294901760
    %1431 = vmatpush1.msra.mxu0 %v1430
    %1432 = vmatprep.subr.mxu0 0.0
    %v1433 = vand.u32 %v1221, 4294901760
    %v1434 = vsub.f32 %v1221, %v1433
    %v1435 = vand.u32 %v1434, 4294901760
    %v1436 = vsub.f32 %v1434, %v1435
    %v1437 = vand.u32 %v1436, 4294901760
    %1438 = vmatpush1.msra.mxu0 %v1437
    %1439 = vmatprep.subr.mxu0 0.0
    %v1440 = vand.u32 %v1220, 4294901760
    %v1441 = vsub.f32 %v1220, %v1440
    %v1442 = vand.u32 %v1441, 4294901760
    %v1443 = vsub.f32 %v1441, %v1442
    %v1444 = vand.u32 %v1443, 4294901760
    %1445 = vmatpush1.msra.mxu0 %v1444
    %1446 = vmatprep.subr.mxu0 0.0
    %1447 = vmatpush2.msra.mxu0 0.0
    %1448 = vmatprep.subr.mxu0 0.0
    %1449 = vmatpush2.msra.mxu0 0.0
    %1450 = vmatprep.subr.mxu0 0.0
    %1451 = vmatpush2.msra.mxu0 0.0
    %1452 = vmatprep.subr.mxu0 0.0
    %1453 = vmatpush2.msra.mxu0 0.0
    %1454 = vmatprep.subr.mxu0 0.0
    %1455 = vmatpush2.msra.mxu0 0.0
    %1456 = vmatprep.subr.mxu0 0.0
    %1457 = vmatpush2.msra.mxu0 0.0
    %1458 = vmatprep.subr.mxu0 0.0
    %1459 = vmatpush2.msra.mxu0 0.0
    %1460 = vmatprep.subr.mxu0 0.0
    %1461 = vmatpush2.msra.mxu0 0.0
    %1462 = vmatprep.subr.mxu0 0.0
    %1463 = vmatpush2.msra.mxu0 0.0
    %1464 = vmatprep.subr.mxu0 0.0
    %1465 = vmatpush2.msra.mxu0 0.0
    %1466 = vmatprep.subr.mxu0 0.0
    %1467 = vmatpush2.msra.mxu0 0.0
    %1468 = vmatprep.subr.mxu0 0.0
    %1469 = vmatpush2.msra.mxu0 0.0
    %1470 = vmatprep.subr.mxu0 0.0
    %1471 = vmatpush2.msra.mxu0 0.0
    %1472 = vmatprep.subr.mxu0 0.0
    %1473 = vmatpush2.msra.mxu0 0.0
    %1474 = vmatprep.subr.mxu0 0.0
    %1475 = vmatpush2.msra.mxu0 0.0
    %1476 = vmatprep.subr.mxu0 0.0
    %1477 = vmatpush2.msra.mxu0 0.0
    %1478 = vmatprep.mubr.f32.mxu0 0.0
    %v1479 = vand.u32 %v1219, 4294901760
    %1480 = vmatmul.mubr.f32.gmra.mxu0 %v1479
    %v1481 = vpop.f32.mrf.mxu0
    %v1482 = vadd.f32 %v1331, %v1481
    %v1483 = vpop.f32.mrf.mxu0
    %1484 = vdwg.mxu0
    %1485 = vmatprep.subr.mxu0 0.0
    %v1486 = vand.u32 %v1235, 4294901760
    %v1487 = vsub.f32 %v1235, %v1486
    %1488 = vmatpush1.msra.mxu0 %v1487
    %1489 = vmatprep.subr.mxu0 0.0
    %v1490 = vand.u32 %v1234, 4294901760
    %v1491 = vsub.f32 %v1234, %v1490
    %1492 = vmatpush1.msra.mxu0 %v1491
    %1493 = vmatprep.subr.mxu0 0.0
    %v1494 = vand.u32 %v1233, 4294901760
    %v1495 = vsub.f32 %v1233, %v1494
    %1496 = vmatpush1.msra.mxu0 %v1495
    %1497 = vmatprep.subr.mxu0 0.0
    %v1498 = vand.u32 %v1232, 4294901760
    %v1499 = vsub.f32 %v1232, %v1498
    %1500 = vmatpush1.msra.mxu0 %v1499
    %1501 = vmatprep.subr.mxu0 0.0
    %v1502 = vand.u32 %v1231, 4294901760
    %v1503 = vsub.f32 %v1231, %v1502
    %1504 = vmatpush1.msra.mxu0 %v1503
    %1505 = vmatprep.subr.mxu0 0.0
    %v1506 = vand.u32 %v1230, 4294901760
    %v1507 = vsub.f32 %v1230, %v1506
    %1508 = vmatpush1.msra.mxu0 %v1507
    %1509 = vmatprep.subr.mxu0 0.0
    %v1510 = vand.u32 %v1229, 4294901760
    %v1511 = vsub.f32 %v1229, %v1510
    %1512 = vmatpush1.msra.mxu0 %v1511
    %1513 = vmatprep.subr.mxu0 0.0
    %v1514 = vand.u32 %v1228, 4294901760
    %v1515 = vsub.f32 %v1228, %v1514
    %1516 = vmatpush1.msra.mxu0 %v1515
    %1517 = vmatprep.subr.mxu0 0.0
    %v1518 = vand.u32 %v1227, 4294901760
    %v1519 = vsub.f32 %v1227, %v1518
    %1520 = vmatpush1.msra.mxu0 %v1519
    %1521 = vmatprep.subr.mxu0 0.0
    %v1522 = vand.u32 %v1226, 4294901760
    %v1523 = vsub.f32 %v1226, %v1522
    %1524 = vmatpush1.msra.mxu0 %v1523
    %1525 = vmatprep.subr.mxu0 0.0
    %v1526 = vand.u32 %v1225, 4294901760
    %v1527 = vsub.f32 %v1225, %v1526
    %1528 = vmatpush1.msra.mxu0 %v1527
    %1529 = vmatprep.subr.mxu0 0.0
    %v1530 = vand.u32 %v1224, 4294901760
    %v1531 = vsub.f32 %v1224, %v1530
    %1532 = vmatpush1.msra.mxu0 %v1531
    %1533 = vmatprep.subr.mxu0 0.0
    %v1534 = vand.u32 %v1223, 4294901760
    %v1535 = vsub.f32 %v1223, %v1534
    %1536 = vmatpush1.msra.mxu0 %v1535
    %1537 = vmatprep.subr.mxu0 0.0
    %v1538 = vand.u32 %v1222, 4294901760
    %v1539 = vsub.f32 %v1222, %v1538
    %1540 = vmatpush1.msra.mxu0 %v1539
    %1541 = vmatprep.subr.mxu0 0.0
    %v1542 = vand.u32 %v1221, 4294901760
    %v1543 = vsub.f32 %v1221, %v1542
    %1544 = vmatpush1.msra.mxu0 %v1543
    %1545 = vmatprep.subr.mxu0 0.0
    %v1546 = vand.u32 %v1220, 4294901760
    %v1547 = vsub.f32 %v1220, %v1546
    %1548 = vmatpush1.msra.mxu0 %v1547
    %1549 = vmatprep.subr.mxu0 0.0
    %1550 = vmatpush2.msra.mxu0 0.0
    %1551 = vmatprep.subr.mxu0 0.0
    %1552 = vmatpush2.msra.mxu0 0.0
    %1553 = vmatprep.subr.mxu0 0.0
    %1554 = vmatpush2.msra.mxu0 0.0
    %1555 = vmatprep.subr.mxu0 0.0
    %1556 = vmatpush2.msra.mxu0 0.0
    %1557 = vmatprep.subr.mxu0 0.0
    %1558 = vmatpush2.msra.mxu0 0.0
    %1559 = vmatprep.subr.mxu0 0.0
    %1560 = vmatpush2.msra.mxu0 0.0
    %1561 = vmatprep.subr.mxu0 0.0
    %1562 = vmatpush2.msra.mxu0 0.0
    %1563 = vmatprep.subr.mxu0 0.0
    %1564 = vmatpush2.msra.mxu0 0.0
    %1565 = vmatprep.subr.mxu0 0.0
    %1566 = vmatpush2.msra.mxu0 0.0
    %1567 = vmatprep.subr.mxu0 0.0
    %1568 = vmatpush2.msra.mxu0 0.0
    %1569 = vmatprep.subr.mxu0 0.0
    %1570 = vmatpush2.msra.mxu0 0.0
    %1571 = vmatprep.subr.mxu0 0.0
    %1572 = vmatpush2.msra.mxu0 0.0
    %1573 = vmatprep.subr.mxu0 0.0
    %1574 = vmatpush2.msra.mxu0 0.0
    %1575 = vmatprep.subr.mxu0 0.0
    %1576 = vmatpush2.msra.mxu0 0.0
    %1577 = vmatprep.subr.mxu0 0.0
    %1578 = vmatpush2.msra.mxu0 0.0
    %1579 = vmatprep.subr.mxu0 0.0
    %1580 = vmatpush2.msra.mxu0 0.0
    %1581 = vmatprep.mubr.f32.mxu0 0.0
    %v1582 = vand.u32 %v1219, 4294901760
    %v1583 = vsub.f32 %v1219, %v1582
    %1584 = vmatmul.mubr.f32.gmra.mxu0 %v1583
    %v1585 = vpop.f32.mrf.mxu0
    %v1586 = vadd.f32 %v1482, %v1585
    %v1587 = vpop.f32.mrf.mxu0
    %1588 = vdwg.mxu0
    %1589 = vmatprep.subr.mxu0 0.0
    %v1590 = vand.u32 %v1235, 4294901760
    %1591 = vmatpush1.msra.mxu0 %v1590
    %1592 = vmatprep.subr.mxu0 0.0
    %v1593 = vand.u32 %v1234, 4294901760
    %1594 = vmatpush1.msra.mxu0 %v1593
    %1595 = vmatprep.subr.mxu0 0.0
    %v1596 = vand.u32 %v1233, 4294901760
    %1597 = vmatpush1.msra.mxu0 %v1596
    %1598 = vmatprep.subr.mxu0 0.0
    %v1599 = vand.u32 %v1232, 4294901760
    %1600 = vmatpush1.msra.mxu0 %v1599
    %1601 = vmatprep.subr.mxu0 0.0
    %v1602 = vand.u32 %v1231, 4294901760
    %1603 = vmatpush1.msra.mxu0 %v1602
    %1604 = vmatprep.subr.mxu0 0.0
    %v1605 = vand.u32 %v1230, 4294901760
    %1606 = vmatpush1.msra.mxu0 %v1605
    %1607 = vmatprep.subr.mxu0 0.0
    %v1608 = vand.u32 %v1229, 4294901760
    %1609 = vmatpush1.msra.mxu0 %v1608
    %1610 = vmatprep.subr.mxu0 0.0
    %v1611 = vand.u32 %v1228, 4294901760
    %1612 = vmatpush1.msra.mxu0 %v1611
    %1613 = vmatprep.subr.mxu0 0.0
    %v1614 = vand.u32 %v1227, 4294901760
    %1615 = vmatpush1.msra.mxu0 %v1614
    %1616 = vmatprep.subr.mxu0 0.0
    %v1617 = vand.u32 %v1226, 4294901760
    %1618 = vmatpush1.msra.mxu0 %v1617
    %1619 = vmatprep.subr.mxu0 0.0
    %v1620 = vand.u32 %v1225, 4294901760
    %1621 = vmatpush1.msra.mxu0 %v1620
    %1622 = vmatprep.subr.mxu0 0.0
    %v1623 = vand.u32 %v1224, 4294901760
    %1624 = vmatpush1.msra.mxu0 %v1623
    %1625 = vmatprep.subr.mxu0 0.0
    %v1626 = vand.u32 %v1223, 4294901760
    %1627 = vmatpush1.msra.mxu0 %v1626
    %1628 = vmatprep.subr.mxu0 0.0
    %v1629 = vand.u32 %v1222, 4294901760
    %1630 = vmatpush1.msra.mxu0 %v1629
    %1631 = vmatprep.subr.mxu0 0.0
    %v1632 = vand.u32 %v1221, 4294901760
    %1633 = vmatpush1.msra.mxu0 %v1632
    %1634 = vmatprep.subr.mxu0 0.0
    %v1635 = vand.u32 %v1220, 4294901760
    %1636 = vmatpush1.msra.mxu0 %v1635
    %1637 = vmatprep.subr.mxu0 0.0
    %1638 = vmatpush2.msra.mxu0 0.0
    %1639 = vmatprep.subr.mxu0 0.0
    %1640 = vmatpush2.msra.mxu0 0.0
    %1641 = vmatprep.subr.mxu0 0.0
    %1642 = vmatpush2.msra.mxu0 0.0
    %1643 = vmatprep.subr.mxu0 0.0
    %1644 = vmatpush2.msra.mxu0 0.0
    %1645 = vmatprep.subr.mxu0 0.0
    %1646 = vmatpush2.msra.mxu0 0.0
    %1647 = vmatprep.subr.mxu0 0.0
    %1648 = vmatpush2.msra.mxu0 0.0
    %1649 = vmatprep.subr.mxu0 0.0
    %1650 = vmatpush2.msra.mxu0 0.0
    %1651 = vmatprep.subr.mxu0 0.0
    %1652 = vmatpush2.msra.mxu0 0.0
    %1653 = vmatprep.subr.mxu0 0.0
    %1654 = vmatpush2.msra.mxu0 0.0
    %1655 = vmatprep.subr.mxu0 0.0
    %1656 = vmatpush2.msra.mxu0 0.0
    %1657 = vmatprep.subr.mxu0 0.0
    %1658 = vmatpush2.msra.mxu0 0.0
    %1659 = vmatprep.subr.mxu0 0.0
    %1660 = vmatpush2.msra.mxu0 0.0
    %1661 = vmatprep.subr.mxu0 0.0
    %1662 = vmatpush2.msra.mxu0 0.0
    %1663 = vmatprep.subr.mxu0 0.0
    %1664 = vmatpush2.msra.mxu0 0.0
    %1665 = vmatprep.subr.mxu0 0.0
    %1666 = vmatpush2.msra.mxu0 0.0
    %1667 = vmatprep.subr.mxu0 0.0
    %1668 = vmatpush2.msra.mxu0 0.0
    %1669 = vmatprep.mubr.f32.mxu0 0.0
    %v1670 = vand.u32 %v1219, 4294901760
    %v1671 = vsub.f32 %v1219, %v1670
    %v1672 = vand.u32 %v1671, 4294901760
    %1673 = vmatmul.mubr.f32.gmra.mxu0 %v1672
    %v1674 = vpop.f32.mrf.mxu0
    %v1675 = vadd.f32 %v1586, %v1674
    %v1676 = vpop.f32.mrf.mxu0
    %1677 = vdwg.mxu0
    %1678 = vmatprep.subr.mxu0 0.0
    %v1679 = vand.u32 %v1235, 4294901760
    %v1680 = vsub.f32 %v1235, %v1679
    %v1681 = vand.u32 %v1680, 4294901760
    %1682 = vmatpush1.msra.mxu0 %v1681
    %1683 = vmatprep.subr.mxu0 0.0
    %v1684 = vand.u32 %v1234, 4294901760
    %v1685 = vsub.f32 %v1234, %v1684
    %v1686 = vand.u32 %v1685, 4294901760
    %1687 = vmatpush1.msra.mxu0 %v1686
    %1688 = vmatprep.subr.mxu0 0.0
    %v1689 = vand.u32 %v1233, 4294901760
    %v1690 = vsub.f32 %v1233, %v1689
    %v1691 = vand.u32 %v1690, 4294901760
    %1692 = vmatpush1.msra.mxu0 %v1691
    %1693 = vmatprep.subr.mxu0 0.0
    %v1694 = vand.u32 %v1232, 4294901760
    %v1695 = vsub.f32 %v1232, %v1694
    %v1696 = vand.u32 %v1695, 4294901760
    %1697 = vmatpush1.msra.mxu0 %v1696
    %1698 = vmatprep.subr.mxu0 0.0
    %v1699 = vand.u32 %v1231, 4294901760
    %v1700 = vsub.f32 %v1231, %v1699
    %v1701 = vand.u32 %v1700, 4294901760
    %1702 = vmatpush1.msra.mxu0 %v1701
    %1703 = vmatprep.subr.mxu0 0.0
    %v1704 = vand.u32 %v1230, 4294901760
    %v1705 = vsub.f32 %v1230, %v1704
    %v1706 = vand.u32 %v1705, 4294901760
    %1707 = vmatpush1.msra.mxu0 %v1706
    %1708 = vmatprep.subr.mxu0 0.0
    %v1709 = vand.u32 %v1229, 4294901760
    %v1710 = vsub.f32 %v1229, %v1709
    %v1711 = vand.u32 %v1710, 4294901760
    %1712 = vmatpush1.msra.mxu0 %v1711
    %1713 = vmatprep.subr.mxu0 0.0
    %v1714 = vand.u32 %v1228, 4294901760
    %v1715 = vsub.f32 %v1228, %v1714
    %v1716 = vand.u32 %v1715, 4294901760
    %1717 = vmatpush1.msra.mxu0 %v1716
    %1718 = vmatprep.subr.mxu0 0.0
    %v1719 = vand.u32 %v1227, 4294901760
    %v1720 = vsub.f32 %v1227, %v1719
    %v1721 = vand.u32 %v1720, 4294901760
    %1722 = vmatpush1.msra.mxu0 %v1721
    %1723 = vmatprep.subr.mxu0 0.0
    %v1724 = vand.u32 %v1226, 4294901760
    %v1725 = vsub.f32 %v1226, %v1724
    %v1726 = vand.u32 %v1725, 4294901760
    %1727 = vmatpush1.msra.mxu0 %v1726
    %1728 = vmatprep.subr.mxu0 0.0
    %v1729 = vand.u32 %v1225, 4294901760
    %v1730 = vsub.f32 %v1225, %v1729
    %v1731 = vand.u32 %v1730, 4294901760
    %1732 = vmatpush1.msra.mxu0 %v1731
    %1733 = vmatprep.subr.mxu0 0.0
    %v1734 = vand.u32 %v1224, 4294901760
    %v1735 = vsub.f32 %v1224, %v1734
    %v1736 = vand.u32 %v1735, 4294901760
    %1737 = vmatpush1.msra.mxu0 %v1736
    %1738 = vmatprep.subr.mxu0 0.0
    %v1739 = vand.u32 %v1223, 4294901760
    %v1740 = vsub.f32 %v1223, %v1739
    %v1741 = vand.u32 %v1740, 4294901760
    %1742 = vmatpush1.msra.mxu0 %v1741
    %1743 = vmatprep.subr.mxu0 0.0
    %v1744 = vand.u32 %v1222, 4294901760
    %v1745 = vsub.f32 %v1222, %v1744
    %v1746 = vand.u32 %v1745, 4294901760
    %1747 = vmatpush1.msra.mxu0 %v1746
    %1748 = vmatprep.subr.mxu0 0.0
    %v1749 = vand.u32 %v1221, 4294901760
    %v1750 = vsub.f32 %v1221, %v1749
    %v1751 = vand.u32 %v1750, 4294901760
    %1752 = vmatpush1.msra.mxu0 %v1751
    %1753 = vmatprep.subr.mxu0 0.0
    %v1754 = vand.u32 %v1220, 4294901760
    %v1755 = vsub.f32 %v1220, %v1754
    %v1756 = vand.u32 %v1755, 4294901760
    %1757 = vmatpush1.msra.mxu0 %v1756
    %1758 = vmatprep.subr.mxu0 0.0
    %1759 = vmatpush2.msra.mxu0 0.0
    %1760 = vmatprep.subr.mxu0 0.0
    %1761 = vmatpush2.msra.mxu0 0.0
    %1762 = vmatprep.subr.mxu0 0.0
    %1763 = vmatpush2.msra.mxu0 0.0
    %1764 = vmatprep.subr.mxu0 0.0
    %1765 = vmatpush2.msra.mxu0 0.0
    %1766 = vmatprep.subr.mxu0 0.0
    %1767 = vmatpush2.msra.mxu0 0.0
    %1768 = vmatprep.subr.mxu0 0.0
    %1769 = vmatpush2.msra.mxu0 0.0
    %1770 = vmatprep.subr.mxu0 0.0
    %1771 = vmatpush2.msra.mxu0 0.0
    %1772 = vmatprep.subr.mxu0 0.0
    %1773 = vmatpush2.msra.mxu0 0.0
    %1774 = vmatprep.subr.mxu0 0.0
    %1775 = vmatpush2.msra.mxu0 0.0
    %1776 = vmatprep.subr.mxu0 0.0
    %1777 = vmatpush2.msra.mxu0 0.0
    %1778 = vmatprep.subr.mxu0 0.0
    %1779 = vmatpush2.msra.mxu0 0.0
    %1780 = vmatprep.subr.mxu0 0.0
    %1781 = vmatpush2.msra.mxu0 0.0
    %1782 = vmatprep.subr.mxu0 0.0
    %1783 = vmatpush2.msra.mxu0 0.0
    %1784 = vmatprep.subr.mxu0 0.0
    %1785 = vmatpush2.msra.mxu0 0.0
    %1786 = vmatprep.subr.mxu0 0.0
    %1787 = vmatpush2.msra.mxu0 0.0
    %1788 = vmatprep.subr.mxu0 0.0
    %1789 = vmatpush2.msra.mxu0 0.0
    %1790 = vmatprep.mubr.f32.mxu0 0.0
    %v1791 = vand.u32 %v1219, 4294901760
    %1792 = vmatmul.mubr.f32.gmra.mxu0 %v1791
    %v1793 = vpop.f32.mrf.mxu0
    %v1794 = vadd.f32 %v1675, %v1793
    %v1795 = vpop.f32.mrf.mxu0
    %1796 = vdwg.mxu0
    %1797 = vmatprep.subr.mxu0 0.0
    %v1798 = vand.u32 %v1235, 4294901760
    %1799 = vmatpush1.msra.mxu0 %v1798
    %1800 = vmatprep.subr.mxu0 0.0
    %v1801 = vand.u32 %v1234, 4294901760
    %1802 = vmatpush1.msra.mxu0 %v1801
    %1803 = vmatprep.subr.mxu0 0.0
    %v1804 = vand.u32 %v1233, 4294901760
    %1805 = vmatpush1.msra.mxu0 %v1804
    %1806 = vmatprep.subr.mxu0 0.0
    %v1807 = vand.u32 %v1232, 4294901760
    %1808 = vmatpush1.msra.mxu0 %v1807
    %1809 = vmatprep.subr.mxu0 0.0
    %v1810 = vand.u32 %v1231, 4294901760
    %1811 = vmatpush1.msra.mxu0 %v1810
    %1812 = vmatprep.subr.mxu0 0.0
    %v1813 = vand.u32 %v1230, 4294901760
    %1814 = vmatpush1.msra.mxu0 %v1813
    %1815 = vmatprep.subr.mxu0 0.0
    %v1816 = vand.u32 %v1229, 4294901760
    %1817 = vmatpush1.msra.mxu0 %v1816
    %1818 = vmatprep.subr.mxu0 0.0
    %v1819 = vand.u32 %v1228, 4294901760
    %1820 = vmatpush1.msra.mxu0 %v1819
    %1821 = vmatprep.subr.mxu0 0.0
    %v1822 = vand.u32 %v1227, 4294901760
    %1823 = vmatpush1.msra.mxu0 %v1822
    %1824 = vmatprep.subr.mxu0 0.0
    %v1825 = vand.u32 %v1226, 4294901760
    %1826 = vmatpush1.msra.mxu0 %v1825
    %1827 = vmatprep.subr.mxu0 0.0
    %v1828 = vand.u32 %v1225, 4294901760
    %1829 = vmatpush1.msra.mxu0 %v1828
    %1830 = vmatprep.subr.mxu0 0.0
    %v1831 = vand.u32 %v1224, 4294901760
    %1832 = vmatpush1.msra.mxu0 %v1831
    %1833 = vmatprep.subr.mxu0 0.0
    %v1834 = vand.u32 %v1223, 4294901760
    %1835 = vmatpush1.msra.mxu0 %v1834
    %1836 = vmatprep.subr.mxu0 0.0
    %v1837 = vand.u32 %v1222, 4294901760
    %1838 = vmatpush1.msra.mxu0 %v1837
    %1839 = vmatprep.subr.mxu0 0.0
    %v1840 = vand.u32 %v1221, 4294901760
    %1841 = vmatpush1.msra.mxu0 %v1840
    %1842 = vmatprep.subr.mxu0 0.0
    %v1843 = vand.u32 %v1220, 4294901760
    %1844 = vmatpush1.msra.mxu0 %v1843
    %1845 = vmatprep.subr.mxu0 0.0
    %1846 = vmatpush2.msra.mxu0 0.0
    %1847 = vmatprep.subr.mxu0 0.0
    %1848 = vmatpush2.msra.mxu0 0.0
    %1849 = vmatprep.subr.mxu0 0.0
    %1850 = vmatpush2.msra.mxu0 0.0
    %1851 = vmatprep.subr.mxu0 0.0
    %1852 = vmatpush2.msra.mxu0 0.0
    %1853 = vmatprep.subr.mxu0 0.0
    %1854 = vmatpush2.msra.mxu0 0.0
    %1855 = vmatprep.subr.mxu0 0.0
    %1856 = vmatpush2.msra.mxu0 0.0
    %1857 = vmatprep.subr.mxu0 0.0
    %1858 = vmatpush2.msra.mxu0 0.0
    %1859 = vmatprep.subr.mxu0 0.0
    %1860 = vmatpush2.msra.mxu0 0.0
    %1861 = vmatprep.subr.mxu0 0.0
    %1862 = vmatpush2.msra.mxu0 0.0
    %1863 = vmatprep.subr.mxu0 0.0
    %1864 = vmatpush2.msra.mxu0 0.0
    %1865 = vmatprep.subr.mxu0 0.0
    %1866 = vmatpush2.msra.mxu0 0.0
    %1867 = vmatprep.subr.mxu0 0.0
    %1868 = vmatpush2.msra.mxu0 0.0
    %1869 = vmatprep.subr.mxu0 0.0
    %1870 = vmatpush2.msra.mxu0 0.0
    %1871 = vmatprep.subr.mxu0 0.0
    %1872 = vmatpush2.msra.mxu0 0.0
    %1873 = vmatprep.subr.mxu0 0.0
    %1874 = vmatpush2.msra.mxu0 0.0
    %1875 = vmatprep.subr.mxu0 0.0
    %1876 = vmatpush2.msra.mxu0 0.0
    %1877 = vmatprep.mubr.f32.mxu0 0.0
    %v1878 = vand.u32 %v1219, 4294901760
    %1879 = vmatmul.mubr.f32.gmra.mxu0 %v1878
    %v1880 = vpop.f32.mrf.mxu0
    %v1881 = vadd.f32 %v1794, %v1880
    %v1882 = vpop.f32.mrf.mxu0
    %1883 = vdwg.mxu0
    %vm1884 = vcmask 64512
    %1885 = vst.msk [vmem:[#allocation7] sm:$0xff] %vm1884, %v1881
    // Predicated region
    $region38: #{tpu_custom_call.1} parent=1 // pred_check
      _
    $region39: #{tpu_custom_call.1} parent=1 // pred_check_branch
      %1887 = sbr.rel (0) target = $region41
    $region40: #{tpu_custom_call.1} parent=1 // pred_region
      %s1889 = ssub.s32 128, 128
      %1890 = vsyncadd [#allocation4], %s1889
      %s1892 = sshll.u32 [#allocation7], 4
      %s1893 = int_to_ptr.vmem [resolvable:$true] %s1892
      %1895 = dma.vmem_to_hbm [thread:$0]  %s1893, 128, %s7, [#allocation4]
    $region41: #{tpu_custom_call.1} parent=1 // pred_fallthru
      _
    // Predicated region
    $region42: #{tpu_custom_call.1} parent=1 // pred_check
      _
    $region43: #{tpu_custom_call.1} parent=1 // pred_check_branch
      %1897 = sbr.rel (0) target = $region45
    $region44: #{tpu_custom_call.1} parent=1 // pred_region
      %1898 = dma.done [#allocation4], 128
    $region45: #{tpu_custom_call.1} parent=1 // pred_fallthru
      _
    %1899 = vsyncpa [#allocation3], 1
    %1900 = vsyncpa [#allocation6], 1
    %1901 = vsyncpa [#allocation4], 1

</llo_original>
